<compile_context>
chip_gen: v6e
topology: v6e:2x2x1
jax: 0.10.0
libtpu: 0.0.40
codegen_flags: <defaults>
</compile_context>

<pallas_src>
import functools
import math

import jax
import jax.numpy as jnp
from jax.experimental import pallas as pl
from jax.experimental.pallas import tpu as pltpu


# ----------------------------------------------------------------------------
# Pallas 3x3 conv kernel (stride 1, padding 1, groups=1), folded-tap matmul
# ----------------------------------------------------------------------------
def _conv3x3_kernel(x_ref, w_ref, b_ref, o_ref, xcol_ref, *, Wp, TH, HT):
    """One row tile of a 3x3 / stride 1 / pad 1 conv for one batch element.

    x_ref   : (Cin, Hp*Wp)    pre-padded, flattened image (compute dtype)
    w_ref   : (Cout, 9*Cin)   folded weights, K index = (ky*3 + kx)*Cin + cin
    b_ref   : (Cout, 1)       bias (f32)
    o_ref   : (Cout, TH*Wp)   width-padded, lane-flat output row tile
    xcol_ref: (9*Cin, TH*Wp)  VMEM im2col scratch (compute dtype)
    """
    cin = x_ref.shape[0]
    P = TH * Wp

    if HT == 1:
        tile_base = 0                       # single row tile: fully static slices
    else:
        tile_base = pl.program_id(1) * P
        if P % 128 == 0:
            tile_base = pl.multiple_of(tile_base, 128)

    # im2col: every tap is a contiguous lane slice of the flattened padded
    # image; sub-ref stores into the scratch bound vreg live ranges.
    for k in range(9):
        ky, kx = divmod(k, 3)
        off = tile_base + (ky + 1) * Wp + (kx - 1)
        xcol_ref[k * cin:(k + 1) * cin, :] = x_ref[:, pl.ds(off, P)]

    # Single folded MXU matmul (K = 9*Cin), f32 accumulation, bias on the VPU.
    acc = jnp.dot(w_ref[...], xcol_ref[...], preferred_element_type=jnp.float32)
    o_ref[...] = (acc + b_ref[...]).astype(o_ref.dtype)


def _pick_row_tile(H, Wp):
    """Row tile TH: divides H; prefers lane-dense (TH*Wp % 128 == 0) tiles of
    >= 2048 lanes to amortize per-grid-step overhead."""
    if H * Wp <= 8192:
        return H                            # whole image per tile (block == full dims)
    dense = [d for d in range(1, H) if H % d == 0 and (d * Wp) % 128 == 0]
    if not dense:
        return H                            # rare; full-height tile
    good = [d for d in dense if d * Wp >= 2048]
    return min(good) if good else max(dense)


_BUFFERED1_OK = [True]   # flips to False if pipeline_mode=pl.Buffered(1) is rejected


def conv3x3_pallas(x_nchw, w_oihw, bias, *, compute_dtype=jnp.bfloat16,
                   out_dtype=None):
    """3x3 conv, stride 1, pad 1, groups=1.

    x: (N, Cin, H, W), w: (Cout, Cin, 3, 3), bias: (Cout,).
    Returns the WIDTH-PADDED result (N, Cout, H, W+2); columns 0 and W+1 hold
    halo garbage and are stripped by the caller (folded into PixelShuffle).
    """
    N, Cin, H, W = x_nchw.shape
    Cout = w_oihw.shape[0]
    out_dtype = x_nchw.dtype if out_dtype is None else out_dtype
    Wp, Hp = W + 2, H + 4
    TH = _pick_row_tile(H, Wp)
    HT = H // TH
    P = TH * Wp

    # One HBM pre-pad per stage (small vs the r^2-larger conv output); removes
    # the in-kernel halo fill and any sequential dependency on the row tiles.
    xp = jnp.pad(x_nchw.astype(compute_dtype), ((0, 0), (0, 0), (2, 2), (1, 1)))
    xp = xp.reshape(N, Cin, Hp * Wp)

    # (Cout, Cin, 3, 3) -> (Cout, ky, kx, Cin) -> (Cout, 9*Cin).
    # NOTE: small channel counts (the C=4 self-check) under-fill the MXU; real
    # SR configs (n_channels >= 64 -> K >= 576) fill it well.
    w_flat = jnp.transpose(w_oihw, (0, 2, 3, 1)).reshape(Cout, 9 * Cin)
    w_flat = w_flat.astype(compute_dtype)
    b2 = bias.reshape(Cout, 1).astype(jnp.float32)

    kernel = functools.partial(_conv3x3_kernel, Wp=Wp, TH=TH, HT=HT)

    cbytes = jnp.dtype(compute_dtype).itemsize
    obytes = jnp.dtype(out_dtype).itemsize
    vmem_need = (Cin * Hp * Wp * cbytes        # resident input image block
                 + Cout * 9 * Cin * cbytes     # folded weights
                 + Cout * 4                    # bias
                 + 2 * Cout * P * obytes       # double-buffered output tile
                 + 9 * Cin * P * cbytes)       # im2col scratch
    vmem_limit = int(min(100 * 2 ** 20, max(32 * 2 ** 20, 2 * vmem_need)))

    def build(single_buffer):
        def inv_spec(shape, imap):
            if single_buffer:
                return pl.BlockSpec(shape, imap, pipeline_mode=pl.Buffered(1))
            return pl.BlockSpec(shape, imap)

        return pl.pallas_call(
            kernel,
            out_shape=jax.ShapeDtypeStruct((N, Cout, H * Wp), out_dtype),
            grid=(N, HT),
            in_specs=[
                inv_spec((None, Cin, Hp * Wp), lambda n, t: (n, 0, 0)),
                inv_spec((Cout, 9 * Cin), lambda n, t: (0, 0)),
                inv_spec((Cout, 1), lambda n, t: (0, 0)),
            ],
            out_specs=pl.BlockSpec((None, Cout, P), lambda n, t: (n, 0, t)),
            scratch_shapes=[pltpu.VMEM((9 * Cin, P), compute_dtype)],
            compiler_params=pltpu.CompilerParams(
                dimension_semantics=("parallel", "parallel"),
                vmem_limit_bytes=vmem_limit,
            ),
        )

    if _BUFFERED1_OK[0]:
        try:
            out_flat = build(True)(xp, w_flat, b2)
        except Exception:
            _BUFFERED1_OK[0] = False
            out_flat = build(False)(xp, w_flat, b2)
    else:
        out_flat = build(False)(xp, w_flat, b2)

    return out_flat.reshape(N, Cout, H, Wp)


# ----------------------------------------------------------------------------
# PixelShuffle (layout glue, matches torch.nn.PixelShuffle semantics)
# ----------------------------------------------------------------------------
def pixel_shuffle(x_nchw, r):
    N, C, H, W = x_nchw.shape
    Cout = C // (r * r)
    x = x_nchw.reshape(N, Cout, r, r, H, W)
    x = jnp.transpose(x, (0, 1, 4, 2, 5, 3))
    return x.reshape(N, Cout, H * r, W * r)


def pixel_shuffle_from_padded(y_pad, W, r):
    """PixelShuffle on the width-padded conv output (N, r*r*C, H, W+2); the 2
    halo columns are stripped inside the same fused reshape/transpose."""
    N, Crr, H, Wp = y_pad.shape
    C = Crr // (r * r)
    y = y_pad.reshape(N, C, r, r, H, Wp)
    y = jnp.transpose(y, (0, 1, 4, 2, 5, 3))        # (N, C, H, r, Wp, r)
    y = y[:, :, :, :, 1:W + 1, :]
    return y.reshape(N, C, H * r, W * r)


# ----------------------------------------------------------------------------
# Parameter construction (_UpsampleBlock / UpsampleBlock)
# ----------------------------------------------------------------------------
def _init_conv_params(key, cin, cout):
    kw, kb = jax.random.split(key)
    fan_in = cin * 9
    bound = 1.0 / math.sqrt(fan_in)
    w = jax.random.uniform(kw, (cout, cin, 3, 3), jnp.float32, -bound, bound)
    b = jax.random.uniform(kb, (cout,), jnp.float32, -bound, bound)
    return w, b


def make_upsample_branch_params(key, n_channels, scale):
    """Params for one _UpsampleBlock: list of (w, b, pixelshuffle_r)."""
    params = []
    if scale in (2, 4, 8):
        n_steps = int(math.log(scale, 2))
        keys = jax.random.split(key, n_steps)
        for i in range(n_steps):
            w, b = _init_conv_params(keys[i], n_channels, 4 * n_channels)
            params.append((w, b, 2))
    elif scale == 3:
        w, b = _init_conv_params(key, n_channels, 9 * n_channels)
        params.append((w, b, 3))
    else:
        raise ValueError(f"unsupported scale {scale}")
    return params


def make_upsample_block_params(key, n_channels, scales):
    keys = jax.random.split(key, len(scales))
    return [make_upsample_branch_params(k, n_channels, s)
            for k, s in zip(keys, scales)]


def upsample_branch_forward(x, branch_params, *, compute_dtype=jnp.bfloat16):
    out = x
    last = len(branch_params) - 1
    for i, (w, b, r) in enumerate(branch_params):
        # Intermediate stages stay in compute_dtype to halve HBM traffic; the
        # final stage is emitted in the input dtype.
        stage_dtype = x.dtype if i == last else compute_dtype
        y_pad = conv3x3_pallas(out, w, b, compute_dtype=compute_dtype,
                               out_dtype=stage_dtype)
        out = pixel_shuffle_from_padded(y_pad, out.shape[-1], r)
    return out


def upsample_block_forward(x, idx_scale, all_params, *, compute_dtype=jnp.bfloat16):
    # idx_scale is a static Python int (mirrors the module's if/elif dispatch).
    return upsample_branch_forward(x, all_params[idx_scale],
                                   compute_dtype=compute_dtype)


# ----------------------------------------------------------------------------
# Reference conv (plain JAX) for the correctness self-check
# ----------------------------------------------------------------------------
def _conv3x3_ref(x, w, b):
    y = jax.lax.conv_general_dilated(
        x, w, window_strides=(1, 1), padding="SAME",
        dimension_numbers=("NCHW", "OIHW", "NCHW"),
        precision=jax.lax.Precision.HIGHEST)
    return y + b[None, :, None, None]


def _branch_ref(x, branch_params):
    out = x
    for w, b, r in branch_params:
        out = pixel_shuffle(_conv3x3_ref(out, w, b), r)
    return out


if __name__ == "__main__":
    key = jax.random.PRNGKey(0)
    k_x, k_p = jax.random.split(key)

    N, C, H, W = 2, 4, 16, 16           # batch=2, n_channels=4, spatial=16
    scales = (2, 3, 4)                  # multi_scale=True (len==3 branch)

    x = jax.random.normal(k_x, (N, C, H, W), jnp.float32)
    params = make_upsample_block_params(k_p, C, scales)

    ok = True
    checks = ((jnp.float32, 1e-3, 1e-3),     # f32 MXU path, tight tolerance
              (jnp.bfloat16, 6e-2, 6e-2))    # bf16 MXU fast path (v6e/v7x)
    for cdt, atol, rtol in checks:
        for idx_scale, s in enumerate(scales):
            out = upsample_block_forward(x, idx_scale, params, compute_dtype=cdt)
            out = jax.block_until_ready(out)
            expected_shape = (N, C, H * s, W * s)
            if out.shape != expected_shape:
                ok = False
                print(f"[{jnp.dtype(cdt).name}] shape mismatch for scale {s}: "
                      f"{out.shape} vs {expected_shape}")
                continue
            ref = jax.block_until_ready(_branch_ref(x, params[idx_scale]))
            if not jnp.allclose(out, ref, atol=atol, rtol=rtol):
                ok = False
                err = float(jnp.max(jnp.abs(out - ref)))
                print(f"[{jnp.dtype(cdt).name}] value mismatch for scale {s}: "
                      f"max err {err}")

    if ok:
        print("KERNEL_OK")
</pallas_src>

<mosaic_0001>
module attributes {stable_mosaic.version = 11 : i64} {
  func.func @_conv3x3_kernel(%arg0: i32, %arg1: i32, %arg2: memref<1x4x360xf32, #tpu.memory_space<vmem>>, %arg3: memref<16x36xf32, #tpu.memory_space<vmem>>, %arg4: memref<16x1xf32, #tpu.memory_space<vmem>>, %arg5: memref<1x16x288xf32, #tpu.memory_space<vmem>>, %arg6: memref<36x288xf32, #tpu.memory_space<vmem>>) attributes {dimension_semantics = [#tpu.dimension_semantics<parallel>, #tpu.dimension_semantics<parallel>], iteration_bounds = array<i64: 2, 1>, scalar_prefetch = 0 : i64, scratch_operands = 1 : i64, tpu.core_type = #tpu.core_type<tc>, window_params = [{pipeline_mode = #tpu.pipeline_mode<synchronous>, transform_indices = @transform_0, window_bounds = array<i64: 1, 4, 360>}, {pipeline_mode = #tpu.pipeline_mode<synchronous>, transform_indices = @transform_1, window_bounds = array<i64: 16, 36>}, {pipeline_mode = #tpu.pipeline_mode<synchronous>, transform_indices = @transform_2, window_bounds = array<i64: 16, 1>}, {transform_indices = @transform_3, window_bounds = array<i64: 1, 16, 288>}]} {
    %c0 = arith.constant 0 : index
    %c0_0 = arith.constant 0 : index
    %c17 = arith.constant 17 : index
    %0 = vector.load %arg2[%c0, %c0_0, %c17] : memref<1x4x360xf32, #tpu.memory_space<vmem>>, vector<1x4x288xf32>
    %1 = vector.shape_cast %0 : vector<1x4x288xf32> to vector<4x288xf32>
    %c0_1 = arith.constant 0 : index
    %c0_2 = arith.constant 0 : index
    %2 = vector.load %arg6[%c0_1, %c0_2] : memref<36x288xf32, #tpu.memory_space<vmem>>, vector<4x288xf32>
    tpu.vector_store %arg6[%c0_1, %c0_2], %1 {strides = array<i32>} : memref<36x288xf32, #tpu.memory_space<vmem>>, vector<4x288xf32>,
    %c0_3 = arith.constant 0 : index
    %c0_4 = arith.constant 0 : index
    %c18 = arith.constant 18 : index
    %3 = vector.load %arg2[%c0_3, %c0_4, %c18] : memref<1x4x360xf32, #tpu.memory_space<vmem>>, vector<1x4x288xf32>
    %4 = vector.shape_cast %3 : vector<1x4x288xf32> to vector<4x288xf32>
    %c4 = arith.constant 4 : index
    %c0_5 = arith.constant 0 : index
    %5 = vector.load %arg6[%c4, %c0_5] : memref<36x288xf32, #tpu.memory_space<vmem>>, vector<4x288xf32>
    tpu.vector_store %arg6[%c4, %c0_5], %4 {strides = array<i32>} : memref<36x288xf32, #tpu.memory_space<vmem>>, vector<4x288xf32>,
    %c0_6 = arith.constant 0 : index
    %c0_7 = arith.constant 0 : index
    %c19 = arith.constant 19 : index
    %6 = vector.load %arg2[%c0_6, %c0_7, %c19] : memref<1x4x360xf32, #tpu.memory_space<vmem>>, vector<1x4x288xf32>
    %7 = vector.shape_cast %6 : vector<1x4x288xf32> to vector<4x288xf32>
    %c8 = arith.constant 8 : index
    %c0_8 = arith.constant 0 : index
    %8 = vector.load %arg6[%c8, %c0_8] : memref<36x288xf32, #tpu.memory_space<vmem>>, vector<4x288xf32>
    tpu.vector_store %arg6[%c8, %c0_8], %7 {strides = array<i32>} : memref<36x288xf32, #tpu.memory_space<vmem>>, vector<4x288xf32>,
    %c0_9 = arith.constant 0 : index
    %c0_10 = arith.constant 0 : index
    %c35 = arith.constant 35 : index
    %9 = vector.load %arg2[%c0_9, %c0_10, %c35] : memref<1x4x360xf32, #tpu.memory_space<vmem>>, vector<1x4x288xf32>
    %10 = vector.shape_cast %9 : vector<1x4x288xf32> to vector<4x288xf32>
    %c12 = arith.constant 12 : index
    %c0_11 = arith.constant 0 : index
    %11 = vector.load %arg6[%c12, %c0_11] : memref<36x288xf32, #tpu.memory_space<vmem>>, vector<4x288xf32>
    tpu.vector_store %arg6[%c12, %c0_11], %10 {strides = array<i32>} : memref<36x288xf32, #tpu.memory_space<vmem>>, vector<4x288xf32>,
    %c0_12 = arith.constant 0 : index
    %c0_13 = arith.constant 0 : index
    %c36 = arith.constant 36 : index
    %12 = vector.load %arg2[%c0_12, %c0_13, %c36] : memref<1x4x360xf32, #tpu.memory_space<vmem>>, vector<1x4x288xf32>
    %13 = vector.shape_cast %12 : vector<1x4x288xf32> to vector<4x288xf32>
    %c16 = arith.constant 16 : index
    %c0_14 = arith.constant 0 : index
    %14 = vector.load %arg6[%c16, %c0_14] : memref<36x288xf32, #tpu.memory_space<vmem>>, vector<4x288xf32>
    tpu.vector_store %arg6[%c16, %c0_14], %13 {strides = array<i32>} : memref<36x288xf32, #tpu.memory_space<vmem>>, vector<4x288xf32>,
    %c0_15 = arith.constant 0 : index
    %c0_16 = arith.constant 0 : index
    %c37 = arith.constant 37 : index
    %15 = vector.load %arg2[%c0_15, %c0_16, %c37] : memref<1x4x360xf32, #tpu.memory_space<vmem>>, vector<1x4x288xf32>
    %16 = vector.shape_cast %15 : vector<1x4x288xf32> to vector<4x288xf32>
    %c20 = arith.constant 20 : index
    %c0_17 = arith.constant 0 : index
    %17 = vector.load %arg6[%c20, %c0_17] : memref<36x288xf32, #tpu.memory_space<vmem>>, vector<4x288xf32>
    tpu.vector_store %arg6[%c20, %c0_17], %16 {strides = array<i32>} : memref<36x288xf32, #tpu.memory_space<vmem>>, vector<4x288xf32>,
    %c0_18 = arith.constant 0 : index
    %c0_19 = arith.constant 0 : index
    %c53 = arith.constant 53 : index
    %18 = vector.load %arg2[%c0_18, %c0_19, %c53] : memref<1x4x360xf32, #tpu.memory_space<vmem>>, vector<1x4x288xf32>
    %19 = vector.shape_cast %18 : vector<1x4x288xf32> to vector<4x288xf32>
    %c24 = arith.constant 24 : index
    %c0_20 = arith.constant 0 : index
    %20 = vector.load %arg6[%c24, %c0_20] : memref<36x288xf32, #tpu.memory_space<vmem>>, vector<4x288xf32>
    tpu.vector_store %arg6[%c24, %c0_20], %19 {strides = array<i32>} : memref<36x288xf32, #tpu.memory_space<vmem>>, vector<4x288xf32>,
    %c0_21 = arith.constant 0 : index
    %c0_22 = arith.constant 0 : index
    %c54 = arith.constant 54 : index
    %21 = vector.load %arg2[%c0_21, %c0_22, %c54] : memref<1x4x360xf32, #tpu.memory_space<vmem>>, vector<1x4x288xf32>
    %22 = vector.shape_cast %21 : vector<1x4x288xf32> to vector<4x288xf32>
    %c28 = arith.constant 28 : index
    %c0_23 = arith.constant 0 : index
    %23 = vector.load %arg6[%c28, %c0_23] : memref<36x288xf32, #tpu.memory_space<vmem>>, vector<4x288xf32>
    tpu.vector_store %arg6[%c28, %c0_23], %22 {strides = array<i32>} : memref<36x288xf32, #tpu.memory_space<vmem>>, vector<4x288xf32>,
    %c0_24 = arith.constant 0 : index
    %c0_25 = arith.constant 0 : index
    %c55 = arith.constant 55 : index
    %24 = vector.load %arg2[%c0_24, %c0_25, %c55] : memref<1x4x360xf32, #tpu.memory_space<vmem>>, vector<1x4x288xf32>
    %25 = vector.shape_cast %24 : vector<1x4x288xf32> to vector<4x288xf32>
    %c32 = arith.constant 32 : index
    %c0_26 = arith.constant 0 : index
    %26 = vector.load %arg6[%c32, %c0_26] : memref<36x288xf32, #tpu.memory_space<vmem>>, vector<4x288xf32>
    tpu.vector_store %arg6[%c32, %c0_26], %25 {strides = array<i32>} : memref<36x288xf32, #tpu.memory_space<vmem>>, vector<4x288xf32>,
    %c0_27 = arith.constant 0 : index
    %c0_28 = arith.constant 0 : index
    %27 = vector.load %arg3[%c0_27, %c0_28] : memref<16x36xf32, #tpu.memory_space<vmem>>, vector<16x36xf32>
    %c0_29 = arith.constant 0 : index
    %c0_30 = arith.constant 0 : index
    %28 = vector.load %arg6[%c0_29, %c0_30] : memref<36x288xf32, #tpu.memory_space<vmem>>, vector<36x288xf32>
    %cst = arith.constant dense<0.000000e+00> : vector<16x288xf32>
    %29 = tpu.matmul %27, %28, %cst {dimension_numbers = #tpu.dot_dimension_numbers<[1], [0], [0], [1], [0, 0, 1, 1], [], []>} : vector<16x36xf32>, vector<36x288xf32>, vector<16x288xf32> -> vector<16x288xf32>
    %c0_31 = arith.constant 0 : index
    %c0_32 = arith.constant 0 : index
    %30 = vector.load %arg4[%c0_31, %c0_32] : memref<16x1xf32, #tpu.memory_space<vmem>>, vector<16x1xf32>
    %31 = vector.broadcast %30 : vector<16x1xf32> to vector<16x288xf32>
    %32 = arith.addf %29, %31 : vector<16x288xf32>
    %c0_33 = arith.constant 0 : index
    %c0_34 = arith.constant 0 : index
    %c0_35 = arith.constant 0 : index
    %33 = vector.load %arg5[%c0_33, %c0_34, %c0_35] : memref<1x16x288xf32, #tpu.memory_space<vmem>>, vector<1x16x288xf32>
    %34 = vector.shape_cast %33 : vector<1x16x288xf32> to vector<16x288xf32>
    %35 = vector.shape_cast %32 : vector<16x288xf32> to vector<1x16x288xf32>
    tpu.vector_store %arg5[%c0_33, %c0_34, %c0_35], %35 {strides = array<i32>} : memref<1x16x288xf32, #tpu.memory_space<vmem>>, vector<1x16x288xf32>,
    return
  }
  func.func @transform_0(%arg0: i32, %arg1: i32) -> (i32, i32, i32) {
    %c0_i32 = arith.constant 0 : i32
    %c0_i32_0 = arith.constant 0 : i32
    %c0_i32_1 = arith.constant 0 : i32
    return %arg0, %c0_i32, %c0_i32_0 : i32, i32, i32
  }
  func.func @transform_1(%arg0: i32, %arg1: i32) -> (i32, i32) {
    %c0_i32 = arith.constant 0 : i32
    %c0_i32_0 = arith.constant 0 : i32
    %c0_i32_1 = arith.constant 0 : i32
    return %c0_i32, %c0_i32_0 : i32, i32
  }
  func.func @transform_2(%arg0: i32, %arg1: i32) -> (i32, i32) {
    %c0_i32 = arith.constant 0 : i32
    %c0_i32_0 = arith.constant 0 : i32
    %c0_i32_1 = arith.constant 0 : i32
    return %c0_i32, %c0_i32_0 : i32, i32
  }
  func.func @transform_3(%arg0: i32, %arg1: i32) -> (i32, i32, i32) {
    %c0_i32 = arith.constant 0 : i32
    %c0_i32_0 = arith.constant 0 : i32
    return %arg0, %c0_i32, %arg1 : i32, i32, i32
  }
}

module attributes {stable_mosaic.version = 11 : i64} {
  func.func @_conv3x3_kernel(%arg0: i32, %arg1: i32, %arg2: memref<1x4x360xf32, #tpu.memory_space<vmem>>, %arg3: memref<16x36xf32, #tpu.memory_space<vmem>>, %arg4: memref<16x1xf32, #tpu.memory_space<vmem>>, %arg5: memref<1x16x288xf32, #tpu.memory_space<vmem>>, %arg6: memref<36x288xf32, #tpu.memory_space<vmem>>) attributes {dimension_semantics = [#tpu.dimension_semantics<parallel>, #tpu.dimension_semantics<parallel>], iteration_bounds = array<i64: 2, 1>, scalar_prefetch = 0 : i64, scratch_operands = 1 : i64, tpu.core_type = #tpu.core_type<tc>, window_params = [{transform_indices = @transform_0, window_bounds = array<i64: 1, 4, 360>}, {pipeline_mode = #tpu.pipeline_mode<synchronous>, transform_indices = @transform_1, window_bounds = array<i64: 16, 36>}, {pipeline_mode = #tpu.pipeline_mode<synchronous>, transform_indices = @transform_2, window_bounds = array<i64: 16, 1>}, {transform_indices = @transform_3, window_bounds = array<i64: 1, 16, 288>}]} {
    %c0 = arith.constant 0 : index
    %c0_0 = arith.constant 0 : index
    %c17 = arith.constant 17 : index
    %0 = vector.load %arg2[%c0, %c0_0, %c17] : memref<1x4x360xf32, #tpu.memory_space<vmem>>, vector<1x4x288xf32>
    %1 = vector.shape_cast %0 : vector<1x4x288xf32> to vector<4x288xf32>
    %c0_1 = arith.constant 0 : index
    %c0_2 = arith.constant 0 : index
    %2 = vector.load %arg6[%c0_1, %c0_2] : memref<36x288xf32, #tpu.memory_space<vmem>>, vector<4x288xf32>
    tpu.vector_store %arg6[%c0_1, %c0_2], %1 {strides = array<i32>} : memref<36x288xf32, #tpu.memory_space<vmem>>, vector<4x288xf32>,
    %c0_3 = arith.constant 0 : index
    %c0_4 = arith.constant 0 : index
    %c18 = arith.constant 18 : index
    %3 = vector.load %arg2[%c0_3, %c0_4, %c18] : memref<1x4x360xf32, #tpu.memory_space<vmem>>, vector<1x4x288xf32>
    %4 = vector.shape_cast %3 : vector<1x4x288xf32> to vector<4x288xf32>
    %c4 = arith.constant 4 : index
    %c0_5 = arith.constant 0 : index
    %5 = vector.load %arg6[%c4, %c0_5] : memref<36x288xf32, #tpu.memory_space<vmem>>, vector<4x288xf32>
    tpu.vector_store %arg6[%c4, %c0_5], %4 {strides = array<i32>} : memref<36x288xf32, #tpu.memory_space<vmem>>, vector<4x288xf32>,
    %c0_6 = arith.constant 0 : index
    %c0_7 = arith.constant 0 : index
    %c19 = arith.constant 19 : index
    %6 = vector.load %arg2[%c0_6, %c0_7, %c19] : memref<1x4x360xf32, #tpu.memory_space<vmem>>, vector<1x4x288xf32>
    %7 = vector.shape_cast %6 : vector<1x4x288xf32> to vector<4x288xf32>
    %c8 = arith.constant 8 : index
    %c0_8 = arith.constant 0 : index
    %8 = vector.load %arg6[%c8, %c0_8] : memref<36x288xf32, #tpu.memory_space<vmem>>, vector<4x288xf32>
    tpu.vector_store %arg6[%c8, %c0_8], %7 {strides = array<i32>} : memref<36x288xf32, #tpu.memory_space<vmem>>, vector<4x288xf32>,
    %c0_9 = arith.constant 0 : index
    %c0_10 = arith.constant 0 : index
    %c35 = arith.constant 35 : index
    %9 = vector.load %arg2[%c0_9, %c0_10, %c35] : memref<1x4x360xf32, #tpu.memory_space<vmem>>, vector<1x4x288xf32>
    %10 = vector.shape_cast %9 : vector<1x4x288xf32> to vector<4x288xf32>
    %c12 = arith.constant 12 : index
    %c0_11 = arith.constant 0 : index
    %11 = vector.load %arg6[%c12, %c0_11] : memref<36x288xf32, #tpu.memory_space<vmem>>, vector<4x288xf32>
    tpu.vector_store %arg6[%c12, %c0_11], %10 {strides = array<i32>} : memref<36x288xf32, #tpu.memory_space<vmem>>, vector<4x288xf32>,
    %c0_12 = arith.constant 0 : index
    %c0_13 = arith.constant 0 : index
    %c36 = arith.constant 36 : index
    %12 = vector.load %arg2[%c0_12, %c0_13, %c36] : memref<1x4x360xf32, #tpu.memory_space<vmem>>, vector<1x4x288xf32>
    %13 = vector.shape_cast %12 : vector<1x4x288xf32> to vector<4x288xf32>
    %c16 = arith.constant 16 : index
    %c0_14 = arith.constant 0 : index
    %14 = vector.load %arg6[%c16, %c0_14] : memref<36x288xf32, #tpu.memory_space<vmem>>, vector<4x288xf32>
    tpu.vector_store %arg6[%c16, %c0_14], %13 {strides = array<i32>} : memref<36x288xf32, #tpu.memory_space<vmem>>, vector<4x288xf32>,
    %c0_15 = arith.constant 0 : index
    %c0_16 = arith.constant 0 : index
    %c37 = arith.constant 37 : index
    %15 = vector.load %arg2[%c0_15, %c0_16, %c37] : memref<1x4x360xf32, #tpu.memory_space<vmem>>, vector<1x4x288xf32>
    %16 = vector.shape_cast %15 : vector<1x4x288xf32> to vector<4x288xf32>
    %c20 = arith.constant 20 : index
    %c0_17 = arith.constant 0 : index
    %17 = vector.load %arg6[%c20, %c0_17] : memref<36x288xf32, #tpu.memory_space<vmem>>, vector<4x288xf32>
    tpu.vector_store %arg6[%c20, %c0_17], %16 {strides = array<i32>} : memref<36x288xf32, #tpu.memory_space<vmem>>, vector<4x288xf32>,
    %c0_18 = arith.constant 0 : index
    %c0_19 = arith.constant 0 : index
    %c53 = arith.constant 53 : index
    %18 = vector.load %arg2[%c0_18, %c0_19, %c53] : memref<1x4x360xf32, #tpu.memory_space<vmem>>, vector<1x4x288xf32>
    %19 = vector.shape_cast %18 : vector<1x4x288xf32> to vector<4x288xf32>
    %c24 = arith.constant 24 : index
    %c0_20 = arith.constant 0 : index
    %20 = vector.load %arg6[%c24, %c0_20] : memref<36x288xf32, #tpu.memory_space<vmem>>, vector<4x288xf32>
    tpu.vector_store %arg6[%c24, %c0_20], %19 {strides = array<i32>} : memref<36x288xf32, #tpu.memory_space<vmem>>, vector<4x288xf32>,
    %c0_21 = arith.constant 0 : index
    %c0_22 = arith.constant 0 : index
    %c54 = arith.constant 54 : index
    %21 = vector.load %arg2[%c0_21, %c0_22, %c54] : memref<1x4x360xf32, #tpu.memory_space<vmem>>, vector<1x4x288xf32>
    %22 = vector.shape_cast %21 : vector<1x4x288xf32> to vector<4x288xf32>
    %c28 = arith.constant 28 : index
    %c0_23 = arith.constant 0 : index
    %23 = vector.load %arg6[%c28, %c0_23] : memref<36x288xf32, #tpu.memory_space<vmem>>, vector<4x288xf32>
    tpu.vector_store %arg6[%c28, %c0_23], %22 {strides = array<i32>} : memref<36x288xf32, #tpu.memory_space<vmem>>, vector<4x288xf32>,
    %c0_24 = arith.constant 0 : index
    %c0_25 = arith.constant 0 : index
    %c55 = arith.constant 55 : index
    %24 = vector.load %arg2[%c0_24, %c0_25, %c55] : memref<1x4x360xf32, #tpu.memory_space<vmem>>, vector<1x4x288xf32>
    %25 = vector.shape_cast %24 : vector<1x4x288xf32> to vector<4x288xf32>
    %c32 = arith.constant 32 : index
    %c0_26 = arith.constant 0 : index
    %26 = vector.load %arg6[%c32, %c0_26] : memref<36x288xf32, #tpu.memory_space<vmem>>, vector<4x288xf32>
    tpu.vector_store %arg6[%c32, %c0_26], %25 {strides = array<i32>} : memref<36x288xf32, #tpu.memory_space<vmem>>, vector<4x288xf32>,
    %c0_27 = arith.constant 0 : index
    %c0_28 = arith.constant 0 : index
    %27 = vector.load %arg3[%c0_27, %c0_28] : memref<16x36xf32, #tpu.memory_space<vmem>>, vector<16x36xf32>
    %c0_29 = arith.constant 0 : index
    %c0_30 = arith.constant 0 : index
    %28 = vector.load %arg6[%c0_29, %c0_30] : memref<36x288xf32, #tpu.memory_space<vmem>>, vector<36x288xf32>
    %cst = arith.constant dense<0.000000e+00> : vector<16x288xf32>
    %29 = tpu.matmul %27, %28, %cst {dimension_numbers = #tpu.dot_dimension_numbers<[1], [0], [0], [1], [0, 0, 1, 1], [], []>} : vector<16x36xf32>, vector<36x288xf32>, vector<16x288xf32> -> vector<16x288xf32>
    %c0_31 = arith.constant 0 : index
    %c0_32 = arith.constant 0 : index
    %30 = vector.load %arg4[%c0_31, %c0_32] : memref<16x1xf32, #tpu.memory_space<vmem>>, vector<16x1xf32>
    %31 = vector.broadcast %30 : vector<16x1xf32> to vector<16x288xf32>
    %32 = arith.addf %29, %31 : vector<16x288xf32>
    %c0_33 = arith.constant 0 : index
    %c0_34 = arith.constant 0 : index
    %c0_35 = arith.constant 0 : index
    %33 = vector.load %arg5[%c0_33, %c0_34, %c0_35] : memref<1x16x288xf32, #tpu.memory_space<vmem>>, vector<1x16x288xf32>
    %34 = vector.shape_cast %33 : vector<1x16x288xf32> to vector<16x288xf32>
    %35 = vector.shape_cast %32 : vector<16x288xf32> to vector<1x16x288xf32>
    tpu.vector_store %arg5[%c0_33, %c0_34, %c0_35], %35 {strides = array<i32>} : memref<1x16x288xf32, #tpu.memory_space<vmem>>, vector<1x16x288xf32>,
    return
  }
  func.func @transform_0(%arg0: i32, %arg1: i32) -> (i32, i32, i32) {
    %c0_i32 = arith.constant 0 : i32
    %c0_i32_0 = arith.constant 0 : i32
    %c0_i32_1 = arith.constant 0 : i32
    return %arg0, %c0_i32, %c0_i32_0 : i32, i32, i32
  }
  func.func @transform_1(%arg0: i32, %arg1: i32) -> (i32, i32) {
    %c0_i32 = arith.constant 0 : i32
    %c0_i32_0 = arith.constant 0 : i32
    %c0_i32_1 = arith.constant 0 : i32
    return %c0_i32, %c0_i32_0 : i32, i32
  }
  func.func @transform_2(%arg0: i32, %arg1: i32) -> (i32, i32) {
    %c0_i32 = arith.constant 0 : i32
    %c0_i32_0 = arith.constant 0 : i32
    %c0_i32_1 = arith.constant 0 : i32
    return %c0_i32, %c0_i32_0 : i32, i32
  }
  func.func @transform_3(%arg0: i32, %arg1: i32) -> (i32, i32, i32) {
    %c0_i32 = arith.constant 0 : i32
    %c0_i32_0 = arith.constant 0 : i32
    return %arg0, %c0_i32, %arg1 : i32, i32, i32
  }
}

</mosaic_0001>

<llo_original>
// kernel: tpu_custom_call.1
$region0: #{tpu_custom_call.1}
  #allocation0 [shape = 'u32[]', space=smem, size = 0x4, offset = 0x4, fixed_abs, tag = 'smem constant byte address 0x4 - core index']
  #allocation1 [shape = 'u32[144,128]{1,0:T(1,128)}', space=vmem, size = 0x12000, scoped, tag = 'internal scratch']
  #allocation2 [shape = 'f32[36,288]{1,0:T(8,128)}', space=vmem, size = 0xf000, scoped, tag = 'scratch operand']
  %s0 = inlined_call_operand.hbm [shape: f32[2,4,360], index: 0, kind: input, shape index: {}]
  %s1 = inlined_call_operand.vmem [shape: f32[16,36], index: 1, kind: input, shape index: {}]
  %s2 = inlined_call_operand.vmem [shape: f32[16,1], index: 2, kind: input, shape index: {}]
  %s3 = inlined_call_operand.hbm [shape: f32[2,16,288], index: 3, kind: output, shape index: {}]
  %s4 = sld [smem:[#allocation0]]
  $region49: #{tpu_custom_call.1} parent=0
    _
  %s6 = ssub.s32 1, %s4
  %s7 = scalar_select 0, %s6, %s4
  $region1: #{tpu_custom_call.1} parent=0
    #allocation3 [shape = 'u8[6144]{0}', space=vmem, size = 0x1800, scoped, tag = 'input window, operand 0, single buffered']
    #allocation4 [shape = 's32[2]{0}', space=sflag, size = 0x8, scoped, tag = 'scoped memory for tpu_custom_call.1']
    #allocation5 [shape = 's32[2]{0}', space=sflag, size = 0x8, scoped, tag = 'scoped memory for tpu_custom_call.1']
    #allocation6 [shape = 'u8[49152]{0}', space=vmem, size = 0xc000, scoped, tag = 'output window, operand 0']
    %8 = vsyncpa [#allocation4], 0
    %9 = vsyncpa [#allocation5], 0
    %s10 = scalar_lea.sflag [#allocation5], 1
    %11 = vsyncpa %s10, 0
    loop: start=0, step=1, limit=4
    $region2: #{tpu_custom_call.1} parent=1 // loop_pre_header
      _
    $region3: #{tpu_custom_call.1} parent=1 // loop_header
      %s13 = sphi 0, %s17
      %p14 = scmp.ge.s32.totalorder %s13, 4
      %s20 = sphi 0, %s32
      %s21 = sphi 0, %s28
      %s22 = sphi 0, %s20
      %s23 = sphi 0, %s21
      %s24 = sphi 0, %s22
      %s25 = sphi 0, %s23
      %s35 = sphi 0, %s37
      %s38 = sphi 0, %s35
      %s39 = sphi 0, %s38
      %s55 = sphi 0, %s39
      %s59 = sphi 0, %s59
      %s61 = sphi 0, %s59
      %s62 = sphi 0, %s61
      %s76 = sphi 0, %s62
      %s80 = sphi 0, %s80
      %s82 = sphi 0, %s80
      %s83 = sphi 0, %s82
      %s97 = sphi 0, %s83
      %s105 = sphi 0, %s107
      %s108 = sphi 0, %s105
      %s109 = sphi 0, %s108
      %s125 = sphi 0, %s109
    $region4: #{tpu_custom_call.1} parent=1 // loop_header_branch
      %16 = sbr.rel (%p14) target = $region8
    $region5: #{tpu_custom_call.1} parent=1 // loop_body
      %s18 = ssub.s32 %s13, 1
      %s19 = ssub.s32 %s13, 2
      %s26 = sadd.s32 1, %s21
      %p27 = scmp.ge.s32.totalorder %s26, 1
      %s28 = scalar_select %p27, 0, %s26
      %s29 = sadd.s32 1, %s20
      %s30 = scalar_select %p27, %s29, %s20
      %p31 = scmp.ge.s32.totalorder %s30, 2
      %s32 = scalar_select %p31, 0, %s30
      %s33 = ssub.s32 %s20, %s32
      %p34 = scmp.eq.s32.totalorder %s33, 0
      %s36 = sadd.s32 %s35, 1
      %s37 = scalar_select %p34, %s35, %s36
      %p40 = pneg %p34
      %p41 = scmp.eq.s32.totalorder %s13, 1
      %p42 = por %p40, %p41
      %p43 = scmp.ne.s32.totalorder %s35, %s38
      %p44 = scmp.eq.s32.totalorder %s13, 0
      %p45 = por %p43, %p44
      %p46 = scmp.ne.s32.totalorder %s35, %s38
      %p47 = scmp.eq.s32.totalorder %s18, 1
      %p48 = por %p46, %p47
      %p49 = scmp.ne.s32.totalorder %s38, %s39
      %p50 = scmp.eq.s32.totalorder %s18, 0
      %p51 = por %p49, %p50
      %p52 = scmp.ne.s32.totalorder %s38, %s39
      %p53 = scmp.eq.s32.totalorder %s19, 1
      %p54 = por %p52, %p53
      %p56 = scmp.ne.s32.totalorder %s39, %s55
      %p57 = scmp.eq.s32.totalorder %s19, 0
      %p58 = por %p56, %p57
      %s60 = sadd.s32 %s59, 1
      %p63 = scmp.eq.s32.totalorder %s13, 1
      %p64 = scmp.ne.s32.totalorder %s59, %s61
      %p65 = scmp.eq.s32.totalorder %s13, 0
      %p66 = por %p64, %p65
      %p67 = scmp.ne.s32.totalorder %s59, %s61
      %p68 = scmp.eq.s32.totalorder %s18, 1
      %p69 = por %p67, %p68
      %p70 = scmp.ne.s32.totalorder %s61, %s62
      %p71 = scmp.eq.s32.totalorder %s18, 0
      %p72 = por %p70, %p71
      %p73 = scmp.ne.s32.totalorder %s61, %s62
      %p74 = scmp.eq.s32.totalorder %s19, 1
      %p75 = por %p73, %p74
      %p77 = scmp.ne.s32.totalorder %s62, %s76
      %p78 = scmp.eq.s32.totalorder %s19, 0
      %p79 = por %p77, %p78
      %s81 = sadd.s32 %s80, 1
      %p84 = scmp.eq.s32.totalorder %s13, 1
      %p85 = scmp.ne.s32.totalorder %s80, %s82
      %p86 = scmp.eq.s32.totalorder %s13, 0
      %p87 = por %p85, %p86
      %p88 = scmp.ne.s32.totalorder %s80, %s82
      %p89 = scmp.eq.s32.totalorder %s18, 1
      %p90 = por %p88, %p89
      %p91 = scmp.ne.s32.totalorder %s82, %s83
      %p92 = scmp.eq.s32.totalorder %s18, 0
      %p93 = por %p91, %p92
      %p94 = scmp.ne.s32.totalorder %s82, %s83
      %p95 = scmp.eq.s32.totalorder %s19, 1
      %p96 = por %p94, %p95
      %p98 = scmp.ne.s32.totalorder %s83, %s97
      %p99 = scmp.eq.s32.totalorder %s19, 0
      %p100 = por %p98, %p99
      %s101 = ssub.s32 %s20, %s32
      %s102 = ssub.s32 %s21, %s28
      %s103 = sor.u32 %s101, %s102
      %p104 = scmp.eq.s32.totalorder %s103, 0
      %s106 = sadd.s32 %s105, 1
      %s107 = scalar_select %p104, %s105, %s106
      %p110 = pneg %p104
      %p111 = scmp.eq.s32.totalorder %s13, 1
      %p112 = por %p110, %p111
      %p113 = scmp.ne.s32.totalorder %s105, %s108
      %p114 = scmp.eq.s32.totalorder %s13, 0
      %p115 = por %p113, %p114
      %p116 = scmp.ne.s32.totalorder %s105, %s108
      %p117 = scmp.eq.s32.totalorder %s18, 1
      %p118 = por %p116, %p117
      %p119 = scmp.ne.s32.totalorder %s108, %s109
      %p120 = scmp.eq.s32.totalorder %s18, 0
      %p121 = por %p119, %p120
      %p122 = scmp.ne.s32.totalorder %s108, %s109
      %p123 = scmp.eq.s32.totalorder %s19, 1
      %p124 = por %p122, %p123
      %p126 = scmp.ne.s32.totalorder %s109, %s125
      %p127 = scmp.eq.s32.totalorder %s19, 0
      %p128 = por %p126, %p127
      %p129 = scmp.le.s32.totalorder 1, %s13
      %p130 = scmp.lt.s32.totalorder %s13, 3
      %p131 = pnand %p129, %p130
      %p132 = pneg %p131
      // Predicated region
      $region9: #{tpu_custom_call.1} parent=5 // pred_check
        _
      $region10: #{tpu_custom_call.1} parent=5 // pred_check_branch
        %134 = sbr.rel (%p131) target = $region12
      $region11: #{tpu_custom_call.1} parent=5 // pred_region
        %s135 = ssub.s32 %s13, 1
        // Predicated region
        $region13: #{tpu_custom_call.1} parent=11 // pred_check
          %p136 = pneg %p51
        $region14: #{tpu_custom_call.1} parent=11 // pred_check_branch
          %138 = sbr.rel (%p136) target = $region16
        $region15: #{tpu_custom_call.1} parent=11 // pred_region
          %s140 = ssub.s32 192, 192
          %141 = vsyncadd [#allocation4], %s140
          %s142 = smul.addr %s22, 3
          %s143 = smul.addr %s142, 64
          %s144 = scalar_lea.hbm %s0, %s143
          %s146 = sshll.u32 [#allocation3], 4
          %s147 = int_to_ptr.vmem [resolvable:$true] %s146
          %149 = dma.hbm_to_vmem [thread:$0]  %s144, 192, %s147, [#allocation4]
        $region16: #{tpu_custom_call.1} parent=11 // pred_fallthru
          _
        // Predicated region
        $region17: #{tpu_custom_call.1} parent=11 // pred_check
          %p150 = pneg %p72
        $region18: #{tpu_custom_call.1} parent=11 // pred_check_branch
          %152 = sbr.rel (%p150) target = $region20
        $region19: #{tpu_custom_call.1} parent=11 // pred_region
          _
        $region20: #{tpu_custom_call.1} parent=11 // pred_fallthru
          _
        // Predicated region
        $region21: #{tpu_custom_call.1} parent=11 // pred_check
          %p153 = pneg %p93
        $region22: #{tpu_custom_call.1} parent=11 // pred_check_branch
          %155 = sbr.rel (%p153) target = $region24
        $region23: #{tpu_custom_call.1} parent=11 // pred_region
          _
        $region24: #{tpu_custom_call.1} parent=11 // pred_fallthru
          _
      $region12: #{tpu_custom_call.1} parent=5 // pred_fallthru
        _
      %p156 = scmp.lt.s32.totalorder %s13, 2
      // Predicated region
      $region25: #{tpu_custom_call.1} parent=5 // pred_check
        %p157 = pneg %p156
      $region26: #{tpu_custom_call.1} parent=5 // pred_check_branch
        %159 = sbr.rel (%p157) target = $region28
      $region27: #{tpu_custom_call.1} parent=5 // pred_region
        _
      $region28: #{tpu_custom_call.1} parent=5 // pred_fallthru
        _
      %p160 = scmp.le.s32.totalorder 1, %s13
      %p161 = scmp.lt.s32.totalorder %s13, 3
      %p162 = pnand %p160, %p161
      %p163 = pneg %p162
      // Predicated region
      $region29: #{tpu_custom_call.1} parent=5 // pred_check
        _
      $region30: #{tpu_custom_call.1} parent=5 // pred_check_branch
        %165 = sbr.rel (%p162) target = $region32
      $region31: #{tpu_custom_call.1} parent=5 // pred_region
        %s166 = ssub.s32 %s13, 1
        // Predicated region
        $region33: #{tpu_custom_call.1} parent=31 // pred_check
          %p167 = pneg %p51
        $region34: #{tpu_custom_call.1} parent=31 // pred_check_branch
          %169 = sbr.rel (%p167) target = $region36
        $region35: #{tpu_custom_call.1} parent=31 // pred_region
          %170 = dma.done [#allocation4], 192
        $region36: #{tpu_custom_call.1} parent=31 // pred_fallthru
          _
        %p171 = pneg %p51
        %p172 = pneg %p48
        %p173 = pneg %p72
        %p174 = pneg %p69
        %p175 = pneg %p93
        %p176 = pneg %p90
        %p177 = pneg %p121
        %p178 = pneg %p118
        %s179 = sand.u32 %s108, 1
        %s180 = scalar_lea.sflag [#allocation5], %s179
        %s181 = sand.u32 %s108, 1
        %s182 = smul.addr %s181, 48
        %s183 = scalar_lea.vmem [#allocation6], %s182
        %s184 = smul.u32 3, %s23
        %v185 = vld [vmem:[#allocation3] sm:$0xff]
        %v186 = vld [vmem:[#allocation3 + $0x8] sm:$0xf]
        %v189 = vcombine.high %v185, %v185
        %190 = vrot.lane.b32.xlu0 %v185, 111
        %v191 = vpop.permute.xlu0 %190
        %192 = vrot.lane.b32.xlu0 %v189, 111
        %v193 = vpop.permute.xlu0 %192
        %194 = vrot.lane.b32.xlu0 %v186, 111
        %v195 = vpop.permute.xlu0 %194
        %vm196 = vcmask 908288
        %v197 = vsel %vm196, %v191, %v193
        %v198 = vsel %vm196, %v193, %v195
        %202 = vst [vmem:[#allocation2] sm:$0xf] %v197
        %203 = vst [vmem:[#allocation2 + $0x8] sm:$0xf] %v198
        %vm204 = vcmask 257024
        %205 = vst.msk [vmem:[#allocation2 + $0x10] sm:$0xf] %vm204, %v195
        %v206 = vld [vmem:[#allocation3] sm:$0xff]
        %v207 = vld [vmem:[#allocation3 + $0x8] sm:$0xf]
        %v210 = vcombine.low %v206, %v206
        %v211 = vcombine.low %v207, %v207
        %212 = vrot.lane.b32.xlu0 %v210, 110
        %v213 = vpop.permute.xlu0 %212
        %214 = vrot.lane.b32.xlu0 %v206, 110
        %v215 = vpop.permute.xlu0 %214
        %216 = vrot.lane.b32.xlu0 %v211, 110
        %v217 = vpop.permute.xlu0 %216
        %vm218 = vcmask 900096
        %v219 = vsel %vm218, %v213, %v215
        %v220 = vsel %vm218, %v215, %v217
        %224 = vst [vmem:[#allocation2] sm:$0xf0] %v219
        %225 = vst [vmem:[#allocation2 + $0x8] sm:$0xf0] %v220
        %vm226 = vcmask 261124
        %227 = vst.msk [vmem:[#allocation2 + $0x10] sm:$0xf0] %vm226, %v217
        %v228 = vld [vmem:[#allocation3] sm:$0xff]
        %v229 = vld [vmem:[#allocation3 + $0x8] sm:$0xf]
        %v232 = vcombine.high %v228, %v228
        %233 = vrot.lane.b32.xlu0 %v228, 109
        %v234 = vpop.permute.xlu0 %233
        %235 = vrot.lane.b32.xlu0 %v232, 109
        %v236 = vpop.permute.xlu0 %235
        %237 = vrot.lane.b32.xlu0 %v229, 109
        %v238 = vpop.permute.xlu0 %237
        %vm239 = vcmask 891904
        %v240 = vsel %vm239, %v234, %v236
        %v241 = vsel %vm239, %v236, %v238
        %245 = vst [vmem:[#allocation2 + $0x18] sm:$0xf] %v240
        %246 = vst [vmem:[#allocation2 + $0x20] sm:$0xf] %v241
        %247 = vst.msk [vmem:[#allocation2 + $0x28] sm:$0xf] %vm204, %v238
        %v248 = vld [vmem:[#allocation3] sm:$0xff]
        %v249 = vld [vmem:[#allocation3 + $0x8] sm:$0xf]
        %v252 = vcombine.low %v248, %v248
        %v253 = vcombine.low %v249, %v249
        %254 = vrot.lane.b32.xlu0 %v252, 93
        %v255 = vpop.permute.xlu0 %254
        %256 = vrot.lane.b32.xlu0 %v248, 93
        %v257 = vpop.permute.xlu0 %256
        %258 = vrot.lane.b32.xlu0 %v253, 93
        %v259 = vpop.permute.xlu0 %258
        %vm260 = vcmask 760832
        %v261 = vsel %vm260, %v255, %v257
        %v262 = vsel %vm260, %v257, %v259
        %266 = vst [vmem:[#allocation2 + $0x18] sm:$0xf0] %v261
        %267 = vst [vmem:[#allocation2 + $0x20] sm:$0xf0] %v262
        %268 = vst.msk [vmem:[#allocation2 + $0x28] sm:$0xf0] %vm226, %v259
        %v269 = vld [vmem:[#allocation3] sm:$0xff]
        %v270 = vld [vmem:[#allocation3 + $0x8] sm:$0xf]
        %v273 = vcombine.high %v269, %v269
        %274 = vrot.lane.b32.xlu0 %v269, 92
        %v275 = vpop.permute.xlu0 %274
        %276 = vrot.lane.b32.xlu0 %v273, 92
        %v277 = vpop.permute.xlu0 %276
        %278 = vrot.lane.b32.xlu0 %v270, 92
        %v279 = vpop.permute.xlu0 %278
        %vm280 = vcmask 752640
        %v281 = vsel %vm280, %v275, %v277
        %v282 = vsel %vm280, %v277, %v279
        %286 = vst [vmem:[#allocation2 + $0x30] sm:$0xf] %v281
        %287 = vst [vmem:[#allocation2 + $0x38] sm:$0xf] %v282
        %288 = vst.msk [vmem:[#allocation2 + $0x40] sm:$0xf] %vm204, %v279
        %v289 = vld [vmem:[#allocation3] sm:$0xff]
        %v290 = vld [vmem:[#allocation3 + $0x8] sm:$0xf]
        %v293 = vcombine.low %v289, %v289
        %v294 = vcombine.low %v290, %v290
        %295 = vrot.lane.b32.xlu0 %v293, 91
        %v296 = vpop.permute.xlu0 %295
        %297 = vrot.lane.b32.xlu0 %v289, 91
        %v298 = vpop.permute.xlu0 %297
        %299 = vrot.lane.b32.xlu0 %v294, 91
        %v300 = vpop.permute.xlu0 %299
        %vm301 = vcmask 744448
        %v302 = vsel %vm301, %v296, %v298
        %v303 = vsel %vm301, %v298, %v300
        %307 = vst [vmem:[#allocation2 + $0x30] sm:$0xf0] %v302
        %308 = vst [vmem:[#allocation2 + $0x38] sm:$0xf0] %v303
        %309 = vst.msk [vmem:[#allocation2 + $0x40] sm:$0xf0] %vm226, %v300
        %v310 = vld [vmem:[#allocation3] sm:$0xff]
        %v311 = vld [vmem:[#allocation3 + $0x8] sm:$0xf]
        %v314 = vcombine.high %v310, %v310
        %315 = vrot.lane.b32.xlu0 %v310, 75
        %v316 = vpop.permute.xlu0 %315
        %317 = vrot.lane.b32.xlu0 %v314, 75
        %v318 = vpop.permute.xlu0 %317
        %319 = vrot.lane.b32.xlu0 %v311, 75
        %v320 = vpop.permute.xlu0 %319
        %vm321 = vcmask 613376
        %v322 = vsel %vm321, %v316, %v318
        %v323 = vsel %vm321, %v318, %v320
        %327 = vst [vmem:[#allocation2 + $0x48] sm:$0xf] %v322
        %328 = vst [vmem:[#allocation2 + $0x50] sm:$0xf] %v323
        %329 = vst.msk [vmem:[#allocation2 + $0x58] sm:$0xf] %vm204, %v320
        %v330 = vld [vmem:[#allocation3] sm:$0xff]
        %v331 = vld [vmem:[#allocation3 + $0x8] sm:$0xf]
        %v334 = vcombine.low %v330, %v330
        %v335 = vcombine.low %v331, %v331
        %336 = vrot.lane.b32.xlu0 %v334, 74
        %v337 = vpop.permute.xlu0 %336
        %338 = vrot.lane.b32.xlu0 %v330, 74
        %v339 = vpop.permute.xlu0 %338
        %340 = vrot.lane.b32.xlu0 %v335, 74
        %v341 = vpop.permute.xlu0 %340
        %vm342 = vcmask 605184
        %v343 = vsel %vm342, %v337, %v339
        %v344 = vsel %vm342, %v339, %v341
        %348 = vst [vmem:[#allocation2 + $0x48] sm:$0xf0] %v343
        %349 = vst [vmem:[#allocation2 + $0x50] sm:$0xf0] %v344
        %350 = vst.msk [vmem:[#allocation2 + $0x58] sm:$0xf0] %vm226, %v341
        %v351 = vld [vmem:[#allocation3] sm:$0xff]
        %v352 = vld [vmem:[#allocation3 + $0x8] sm:$0xf]
        %v355 = vcombine.high %v351, %v351
        %356 = vrot.lane.b32.xlu0 %v351, 73
        %v357 = vpop.permute.xlu0 %356
        %358 = vrot.lane.b32.xlu0 %v355, 73
        %v359 = vpop.permute.xlu0 %358
        %360 = vrot.lane.b32.xlu0 %v352, 73
        %v361 = vpop.permute.xlu0 %360
        %vm362 = vcmask 596992
        %v363 = vsel %vm362, %v357, %v359
        %v364 = vsel %vm362, %v359, %v361
        %368 = vst [vmem:[#allocation2 + $0x60] sm:$0xf] %v363
        %369 = vst [vmem:[#allocation2 + $0x68] sm:$0xf] %v364
        %370 = vst.msk [vmem:[#allocation2 + $0x70] sm:$0xf] %vm204, %v361
        %v371 = vld [vmem:[%s1] sm:$0xff]
        %v372 = vld [vmem:[%s1 + $0x8] sm:$0xff]
        %v373 = vld [vmem:[#allocation2] sm:$0xff]
        %v374 = vld [vmem:[#allocation2 + $0x8] sm:$0xff]
        %v375 = vld [vmem:[#allocation2 + $0x10] sm:$0xff]
        %v376 = vld [vmem:[#allocation2 + $0x18] sm:$0xff]
        %v377 = vld [vmem:[#allocation2 + $0x20] sm:$0xff]
        %v378 = vld [vmem:[#allocation2 + $0x28] sm:$0xff]
        %v379 = vld [vmem:[#allocation2 + $0x30] sm:$0xff]
        %v380 = vld [vmem:[#allocation2 + $0x38] sm:$0xff]
        %v381 = vld [vmem:[#allocation2 + $0x40] sm:$0xff]
        %v382 = vld [vmem:[#allocation2 + $0x48] sm:$0xff]
        %v383 = vld [vmem:[#allocation2 + $0x50] sm:$0xff]
        %v384 = vld [vmem:[#allocation2 + $0x58] sm:$0xff]
        %v385 = vld [vmem:[#allocation2 + $0x60] sm:$0xf]
        %v386 = vld [vmem:[#allocation2 + $0x68] sm:$0xf]
        %v387 = vld [vmem:[#allocation2 + $0x70] sm:$0xf]
        %v388 = vld [vmem:[%s2] sm:$0xff]
        %v389 = vld [vmem:[%s2 + $0x8] sm:$0xff]
        %391 = vset.pattern.permute.xlu0 0
        %392 = vperm.xlu0 %391, %v388
        %v393 = vpop.permute.xlu0 %392
        %396 = vset.pattern.permute.xlu0 0
        %397 = vperm.xlu0 %396, %v389
        %v398 = vpop.permute.xlu0 %397
        %vm400 = vcmask 293888
        %v402 = vsel %vm400, %v371, 0
        %v405 = vsel %vm400, %v372, 0
        %vm407 = vcmask 1043456
        %v409 = vsel %vm407, %v385, 0
        %v412 = vsel %vm407, %v386, 0
        %v415 = vsel %vm407, %v387, 0
        %417 = vmatprep.subr.mxu0 0.0
        %418 = vmatpush1.msra.mxu0 0.0
        %419 = vmatprep.subr.mxu0 0.0
        %420 = vmatpush1.msra.mxu0 0.0
        %421 = vmatprep.subr.mxu0 0.0
        %422 = vmatpush1.msra.mxu0 0.0
        %423 = vmatprep.subr.mxu0 0.0
        %424 = vmatpush1.msra.mxu0 0.0
        %425 = vmatprep.subr.mxu0 0.0
        %426 = vmatpush1.msra.mxu0 0.0
        %427 = vmatprep.subr.mxu0 0.0
        %428 = vmatpush1.msra.mxu0 0.0
        %429 = vmatprep.subr.mxu0 0.0
        %430 = vmatpush1.msra.mxu0 0.0
        %431 = vmatprep.subr.mxu0 0.0
        %432 = vmatpush1.msra.mxu0 0.0
        %433 = vmatprep.subr.mxu0 0.0
        %434 = vmatpush1.msra.mxu0 0.0
        %435 = vmatprep.subr.mxu0 0.0
        %436 = vmatpush1.msra.mxu0 0.0
        %437 = vmatprep.subr.mxu0 0.0
        %438 = vmatpush1.msra.mxu0 0.0
        %439 = vmatprep.subr.mxu0 %v412
        %440 = vmatpush1.msra.mxu0 %v409
        %441 = vmatprep.subr.mxu0 %v383
        %442 = vmatpush1.msra.mxu0 %v382
        %443 = vmatprep.subr.mxu0 %v380
        %444 = vmatpush1.msra.mxu0 %v379
        %445 = vmatprep.subr.mxu0 %v377
        %446 = vmatpush1.msra.mxu0 %v376
        %447 = vmatprep.subr.mxu0 %v374
        %448 = vmatpush1.msra.mxu0 %v373
        %449 = vmatprep.subr.mxu0 0.0
        %450 = vmatpush2.msra.mxu0 0.0
        %451 = vmatprep.subr.mxu0 0.0
        %452 = vmatpush2.msra.mxu0 0.0
        %453 = vmatprep.subr.mxu0 0.0
        %454 = vmatpush2.msra.mxu0 0.0
        %455 = vmatprep.subr.mxu0 0.0
        %456 = vmatpush2.msra.mxu0 0.0
        %457 = vmatprep.subr.mxu0 0.0
        %458 = vmatpush2.msra.mxu0 0.0
        %459 = vmatprep.subr.mxu0 0.0
        %460 = vmatpush2.msra.mxu0 0.0
        %461 = vmatprep.subr.mxu0 0.0
        %462 = vmatpush2.msra.mxu0 0.0
        %463 = vmatprep.subr.mxu0 0.0
        %464 = vmatpush2.msra.mxu0 0.0
        %465 = vmatprep.subr.mxu0 0.0
        %466 = vmatpush2.msra.mxu0 0.0
        %467 = vmatprep.subr.mxu0 0.0
        %468 = vmatpush2.msra.mxu0 0.0
        %469 = vmatprep.subr.mxu0 0.0
        %470 = vmatpush2.msra.mxu0 0.0
        %471 = vmatprep.subr.mxu0 0.0
        %472 = vmatpush2.msra.mxu0 0.0
        %473 = vmatprep.subr.mxu0 0.0
        %474 = vmatpush2.msra.mxu0 0.0
        %475 = vmatprep.subr.mxu0 0.0
        %476 = vmatpush2.msra.mxu0 0.0
        %477 = vmatprep.subr.mxu0 0.0
        %478 = vmatpush2.msra.mxu0 0.0
        %479 = vmatprep.subr.mxu0 0.0
        %480 = vmatpush2.msra.mxu0 0.0
        %481 = vmatprep.mubr.f32.mxu0 0.0
        %482 = vmatmul.mubr.f32.gmra.mxu0 %v402
        %v483 = vpop.f32.mrf.mxu0
        %v484 = vadd.f32 %v393, %v483
        %v485 = vpop.f32.mrf.mxu0
        %v486 = vadd.f32 %v393, %v485
        %487 = vmatprep.mubr.f32.mxu0 0.0
        %488 = vmatmul.mubr.f32.gmra.mxu0 %v405
        %v489 = vpop.f32.mrf.mxu0
        %v490 = vadd.f32 %v398, %v489
        %v491 = vpop.f32.mrf.mxu0
        %v492 = vadd.f32 %v398, %v491
        %493 = vdwg.mxu0
        %494 = vmatprep.subr.mxu0 0.0
        %495 = vmatpush1.msra.mxu0 0.0
        %496 = vmatprep.subr.mxu0 0.0
        %497 = vmatpush1.msra.mxu0 0.0
        %498 = vmatprep.subr.mxu0 0.0
        %499 = vmatpush1.msra.mxu0 0.0
        %500 = vmatprep.subr.mxu0 0.0
        %501 = vmatpush1.msra.mxu0 0.0
        %502 = vmatprep.subr.mxu0 0.0
        %503 = vmatpush1.msra.mxu0 0.0
        %504 = vmatprep.subr.mxu0 0.0
        %505 = vmatpush1.msra.mxu0 0.0
        %506 = vmatprep.subr.mxu0 0.0
        %507 = vmatpush1.msra.mxu0 0.0
        %508 = vmatprep.subr.mxu0 0.0
        %509 = vmatpush1.msra.mxu0 0.0
        %510 = vmatprep.subr.mxu0 0.0
        %511 = vmatpush1.msra.mxu0 0.0
        %512 = vmatprep.subr.mxu0 0.0
        %513 = vmatpush1.msra.mxu0 0.0
        %514 = vmatprep.subr.mxu0 0.0
        %515 = vmatpush1.msra.mxu0 0.0
        %516 = vmatprep.subr.mxu0 0.0
        %517 = vmatpush1.msra.mxu0 %v415
        %518 = vmatprep.subr.mxu0 0.0
        %519 = vmatpush1.msra.mxu0 %v384
        %520 = vmatprep.subr.mxu0 0.0
        %521 = vmatpush1.msra.mxu0 %v381
        %522 = vmatprep.subr.mxu0 0.0
        %523 = vmatpush1.msra.mxu0 %v378
        %524 = vmatprep.subr.mxu0 0.0
        %525 = vmatpush1.msra.mxu0 %v375
        %526 = vmatprep.subr.mxu0 0.0
        %527 = vmatpush2.msra.mxu0 0.0
        %528 = vmatprep.subr.mxu0 0.0
        %529 = vmatpush2.msra.mxu0 0.0
        %530 = vmatprep.subr.mxu0 0.0
        %531 = vmatpush2.msra.mxu0 0.0
        %532 = vmatprep.subr.mxu0 0.0
        %533 = vmatpush2.msra.mxu0 0.0
        %534 = vmatprep.subr.mxu0 0.0
        %535 = vmatpush2.msra.mxu0 0.0
        %536 = vmatprep.subr.mxu0 0.0
        %537 = vmatpush2.msra.mxu0 0.0
        %538 = vmatprep.subr.mxu0 0.0
        %539 = vmatpush2.msra.mxu0 0.0
        %540 = vmatprep.subr.mxu0 0.0
        %541 = vmatpush2.msra.mxu0 0.0
        %542 = vmatprep.subr.mxu0 0.0
        %543 = vmatpush2.msra.mxu0 0.0
        %544 = vmatprep.subr.mxu0 0.0
        %545 = vmatpush2.msra.mxu0 0.0
        %546 = vmatprep.subr.mxu0 0.0
        %547 = vmatpush2.msra.mxu0 0.0
        %548 = vmatprep.subr.mxu0 0.0
        %549 = vmatpush2.msra.mxu0 0.0
        %550 = vmatprep.subr.mxu0 0.0
        %551 = vmatpush2.msra.mxu0 0.0
        %552 = vmatprep.subr.mxu0 0.0
        %553 = vmatpush2.msra.mxu0 0.0
        %554 = vmatprep.subr.mxu0 0.0
        %555 = vmatpush2.msra.mxu0 0.0
        %556 = vmatprep.subr.mxu0 0.0
        %557 = vmatpush2.msra.mxu0 0.0
        %558 = vmatprep.mubr.f32.mxu0 0.0
        %559 = vmatmul.mubr.f32.gmra.mxu0 %v402
        %v560 = vpop.f32.mrf.mxu0
        %v561 = vadd.f32 %v393, %v560
        %v562 = vpop.f32.mrf.mxu0
        %563 = vmatprep.mubr.f32.mxu0 0.0
        %564 = vmatmul.mubr.f32.gmra.mxu0 %v405
        %v565 = vpop.f32.mrf.mxu0
        %v566 = vadd.f32 %v398, %v565
        %v567 = vpop.f32.mrf.mxu0
        %568 = vdwg.mxu0
        %569 = vst [vmem:[%s183] sm:$0xff] %v484
        %570 = vst [vmem:[%s183 + $0x8] sm:$0xff] %v486
        %vm571 = vcmask 261120
        %572 = vst.msk [vmem:[%s183 + $0x10] sm:$0xff] %vm571, %v561
        %573 = vst [vmem:[%s183 + $0x18] sm:$0xff] %v490
        %574 = vst [vmem:[%s183 + $0x20] sm:$0xff] %v492
        %575 = vst.msk [vmem:[%s183 + $0x28] sm:$0xff] %vm571, %v566
        %s576 = sand.u32 %s108, 1
        %s577 = scalar_lea.sflag [#allocation5], %s576
        %s578 = sand.u32 %s108, 1
        %s579 = smul.addr %s578, 48
        %s580 = scalar_lea.vmem [#allocation6], %s579
        // Predicated region
        $region37: #{tpu_custom_call.1} parent=31 // pred_check
          %p581 = pneg %p118
        $region38: #{tpu_custom_call.1} parent=31 // pred_check_branch
          %583 = sbr.rel (%p581) target = $region40
        $region39: #{tpu_custom_call.1} parent=31 // pred_region
          %s584 = smul.u32 3, %s23
          %s586 = ssub.s32 768, 768
          %587 = vsyncadd %s577, %s586
          %s588 = smul.addr %s22, 6
          %s589 = sadd.s32 %s584, %s588
          %s590 = smul.addr %s589, 128
          %s591 = scalar_lea.hbm %s3, %s590
          %s592 = sshll.u32 %s580, 4
          %s593 = int_to_ptr.vmem [resolvable:$true] %s592
          %598 = dma.vmem_to_hbm [thread:$0]  %s593, 768, %s591, %s577, 384, 384, 24
        $region40: #{tpu_custom_call.1} parent=31 // pred_fallthru
          _
      $region32: #{tpu_custom_call.1} parent=5 // pred_fallthru
        _
      %p599 = scmp.le.s32.totalorder 2, %s13
      // Predicated region
      $region41: #{tpu_custom_call.1} parent=5 // pred_check
        %p600 = pneg %p599
      $region42: #{tpu_custom_call.1} parent=5 // pred_check_branch
        %602 = sbr.rel (%p600) target = $region44
      $region43: #{tpu_custom_call.1} parent=5 // pred_region
        %s603 = ssub.s32 %s13, 2
        // Predicated region
        $region45: #{tpu_custom_call.1} parent=43 // pred_check
          %p604 = pneg %p124
        $region46: #{tpu_custom_call.1} parent=43 // pred_check_branch
          %606 = sbr.rel (%p604) target = $region48
        $region47: #{tpu_custom_call.1} parent=43 // pred_region
          %s607 = sand.u32 %s109, 1
          %s608 = scalar_lea.sflag [#allocation5], %s607
          %s609 = sand.u32 %s109, 1
          %s610 = smul.addr %s609, 48
          %s611 = scalar_lea.vmem [#allocation6], %s610
          %612 = dma.done %s608, 768
        $region48: #{tpu_custom_call.1} parent=43 // pred_fallthru
          _
      $region44: #{tpu_custom_call.1} parent=5 // pred_fallthru
        _
    $region6: #{tpu_custom_call.1} parent=1 // loop_footer
      %s17 = sadd.s32 1, %s13
    $region7: #{tpu_custom_call.1} parent=1 // loop_footer_branch
      %12 = sbr.rel target = $region3
    $region8: #{tpu_custom_call.1} parent=1 // loop_exit
      _
    %613 = vsyncpa [#allocation4], 1
    %s614 = scalar_lea.sflag [#allocation4], 1
    %615 = vsyncpa %s614, 1
    %616 = vsyncpa [#allocation5], 1
    %s617 = scalar_lea.sflag [#allocation5], 1
    %618 = vsyncpa %s617, 1

// kernel: tpu_custom_call.1
$region0: #{tpu_custom_call.1}
  #allocation0 [shape = 'u32[]', space=smem, size = 0x4, offset = 0x4, fixed_abs, tag = 'smem constant byte address 0x4 - core index']
  #allocation1 [shape = 'u32[144,128]{1,0:T(1,128)}', space=vmem, size = 0x12000, scoped, tag = 'internal scratch']
  #allocation2 [shape = 'f32[36,288]{1,0:T(8,128)}', space=vmem, size = 0xf000, scoped, tag = 'scratch operand']
  %s0 = inlined_call_operand.hbm [shape: f32[2,4,360], index: 0, kind: input, shape index: {}]
  %s1 = inlined_call_operand.vmem [shape: f32[16,36], index: 1, kind: input, shape index: {}]
  %s2 = inlined_call_operand.vmem [shape: f32[16,1], index: 2, kind: input, shape index: {}]
  %s3 = inlined_call_operand.hbm [shape: f32[2,16,288], index: 3, kind: output, shape index: {}]
  %s4 = sld [smem:[#allocation0]]
  $region49: #{tpu_custom_call.1} parent=0
    _
  %s6 = ssub.s32 1, %s4
  %s7 = scalar_select 0, %s6, %s4
  $region1: #{tpu_custom_call.1} parent=0
    #allocation3 [shape = 'u8[12288]{0}', space=vmem, size = 0x3000, scoped, tag = 'input window, operand 0']
    #allocation4 [shape = 's32[2]{0}', space=sflag, size = 0x8, scoped, tag = 'scoped memory for tpu_custom_call.1']
    #allocation5 [shape = 's32[2]{0}', space=sflag, size = 0x8, scoped, tag = 'scoped memory for tpu_custom_call.1']
    #allocation6 [shape = 'u8[49152]{0}', space=vmem, size = 0xc000, scoped, tag = 'output window, operand 0']
    %8 = vsyncpa [#allocation4], 0
    %s9 = scalar_lea.sflag [#allocation4], 1
    %10 = vsyncpa %s9, 0
    %11 = vsyncpa [#allocation5], 0
    %s12 = scalar_lea.sflag [#allocation5], 1
    %13 = vsyncpa %s12, 0
    loop: start=0, step=1, limit=4
    $region2: #{tpu_custom_call.1} parent=1 // loop_pre_header
      _
    $region3: #{tpu_custom_call.1} parent=1 // loop_header
      %s15 = sphi 0, %s19
      %p16 = scmp.ge.s32.totalorder %s15, 4
      %s22 = sphi 0, %s34
      %s23 = sphi 0, %s30
      %s24 = sphi 0, %s22
      %s25 = sphi 0, %s23
      %s26 = sphi 0, %s24
      %s27 = sphi 0, %s25
      %s37 = sphi 0, %s39
      %s40 = sphi 0, %s37
      %s41 = sphi 0, %s40
      %s57 = sphi 0, %s41
      %s61 = sphi 0, %s61
      %s63 = sphi 0, %s61
      %s64 = sphi 0, %s63
      %s78 = sphi 0, %s64
      %s82 = sphi 0, %s82
      %s84 = sphi 0, %s82
      %s85 = sphi 0, %s84
      %s99 = sphi 0, %s85
      %s107 = sphi 0, %s109
      %s110 = sphi 0, %s107
      %s111 = sphi 0, %s110
      %s127 = sphi 0, %s111
    $region4: #{tpu_custom_call.1} parent=1 // loop_header_branch
      %18 = sbr.rel (%p16) target = $region8
    $region5: #{tpu_custom_call.1} parent=1 // loop_body
      %s20 = ssub.s32 %s15, 1
      %s21 = ssub.s32 %s15, 2
      %s28 = sadd.s32 1, %s23
      %p29 = scmp.ge.s32.totalorder %s28, 1
      %s30 = scalar_select %p29, 0, %s28
      %s31 = sadd.s32 1, %s22
      %s32 = scalar_select %p29, %s31, %s22
      %p33 = scmp.ge.s32.totalorder %s32, 2
      %s34 = scalar_select %p33, 0, %s32
      %s35 = ssub.s32 %s22, %s34
      %p36 = scmp.eq.s32.totalorder %s35, 0
      %s38 = sadd.s32 %s37, 1
      %s39 = scalar_select %p36, %s37, %s38
      %p42 = pneg %p36
      %p43 = scmp.eq.s32.totalorder %s15, 1
      %p44 = por %p42, %p43
      %p45 = scmp.ne.s32.totalorder %s37, %s40
      %p46 = scmp.eq.s32.totalorder %s15, 0
      %p47 = por %p45, %p46
      %p48 = scmp.ne.s32.totalorder %s37, %s40
      %p49 = scmp.eq.s32.totalorder %s20, 1
      %p50 = por %p48, %p49
      %p51 = scmp.ne.s32.totalorder %s40, %s41
      %p52 = scmp.eq.s32.totalorder %s20, 0
      %p53 = por %p51, %p52
      %p54 = scmp.ne.s32.totalorder %s40, %s41
      %p55 = scmp.eq.s32.totalorder %s21, 1
      %p56 = por %p54, %p55
      %p58 = scmp.ne.s32.totalorder %s41, %s57
      %p59 = scmp.eq.s32.totalorder %s21, 0
      %p60 = por %p58, %p59
      %s62 = sadd.s32 %s61, 1
      %p65 = scmp.eq.s32.totalorder %s15, 1
      %p66 = scmp.ne.s32.totalorder %s61, %s63
      %p67 = scmp.eq.s32.totalorder %s15, 0
      %p68 = por %p66, %p67
      %p69 = scmp.ne.s32.totalorder %s61, %s63
      %p70 = scmp.eq.s32.totalorder %s20, 1
      %p71 = por %p69, %p70
      %p72 = scmp.ne.s32.totalorder %s63, %s64
      %p73 = scmp.eq.s32.totalorder %s20, 0
      %p74 = por %p72, %p73
      %p75 = scmp.ne.s32.totalorder %s63, %s64
      %p76 = scmp.eq.s32.totalorder %s21, 1
      %p77 = por %p75, %p76
      %p79 = scmp.ne.s32.totalorder %s64, %s78
      %p80 = scmp.eq.s32.totalorder %s21, 0
      %p81 = por %p79, %p80
      %s83 = sadd.s32 %s82, 1
      %p86 = scmp.eq.s32.totalorder %s15, 1
      %p87 = scmp.ne.s32.totalorder %s82, %s84
      %p88 = scmp.eq.s32.totalorder %s15, 0
      %p89 = por %p87, %p88
      %p90 = scmp.ne.s32.totalorder %s82, %s84
      %p91 = scmp.eq.s32.totalorder %s20, 1
      %p92 = por %p90, %p91
      %p93 = scmp.ne.s32.totalorder %s84, %s85
      %p94 = scmp.eq.s32.totalorder %s20, 0
      %p95 = por %p93, %p94
      %p96 = scmp.ne.s32.totalorder %s84, %s85
      %p97 = scmp.eq.s32.totalorder %s21, 1
      %p98 = por %p96, %p97
      %p100 = scmp.ne.s32.totalorder %s85, %s99
      %p101 = scmp.eq.s32.totalorder %s21, 0
      %p102 = por %p100, %p101
      %s103 = ssub.s32 %s22, %s34
      %s104 = ssub.s32 %s23, %s30
      %s105 = sor.u32 %s103, %s104
      %p106 = scmp.eq.s32.totalorder %s105, 0
      %s108 = sadd.s32 %s107, 1
      %s109 = scalar_select %p106, %s107, %s108
      %p112 = pneg %p106
      %p113 = scmp.eq.s32.totalorder %s15, 1
      %p114 = por %p112, %p113
      %p115 = scmp.ne.s32.totalorder %s107, %s110
      %p116 = scmp.eq.s32.totalorder %s15, 0
      %p117 = por %p115, %p116
      %p118 = scmp.ne.s32.totalorder %s107, %s110
      %p119 = scmp.eq.s32.totalorder %s20, 1
      %p120 = por %p118, %p119
      %p121 = scmp.ne.s32.totalorder %s110, %s111
      %p122 = scmp.eq.s32.totalorder %s20, 0
      %p123 = por %p121, %p122
      %p124 = scmp.ne.s32.totalorder %s110, %s111
      %p125 = scmp.eq.s32.totalorder %s21, 1
      %p126 = por %p124, %p125
      %p128 = scmp.ne.s32.totalorder %s111, %s127
      %p129 = scmp.eq.s32.totalorder %s21, 0
      %p130 = por %p128, %p129
      %p131 = scmp.le.s32.totalorder 1, %s15
      %p132 = scmp.lt.s32.totalorder %s15, 3
      %p133 = pnand %p131, %p132
      %p134 = pneg %p133
      // Predicated region
      $region9: #{tpu_custom_call.1} parent=5 // pred_check
        _
      $region10: #{tpu_custom_call.1} parent=5 // pred_check_branch
        %136 = sbr.rel (%p133) target = $region12
      $region11: #{tpu_custom_call.1} parent=5 // pred_region
        %s137 = ssub.s32 %s15, 1
        // Predicated region
        $region13: #{tpu_custom_call.1} parent=11 // pred_check
          %p138 = pneg %p74
        $region14: #{tpu_custom_call.1} parent=11 // pred_check_branch
          %140 = sbr.rel (%p138) target = $region16
        $region15: #{tpu_custom_call.1} parent=11 // pred_region
          _
        $region16: #{tpu_custom_call.1} parent=11 // pred_fallthru
          _
        // Predicated region
        $region17: #{tpu_custom_call.1} parent=11 // pred_check
          %p141 = pneg %p95
        $region18: #{tpu_custom_call.1} parent=11 // pred_check_branch
          %143 = sbr.rel (%p141) target = $region20
        $region19: #{tpu_custom_call.1} parent=11 // pred_region
          _
        $region20: #{tpu_custom_call.1} parent=11 // pred_fallthru
          _
      $region12: #{tpu_custom_call.1} parent=5 // pred_fallthru
        _
      %p144 = scmp.lt.s32.totalorder %s15, 2
      // Predicated region
      $region21: #{tpu_custom_call.1} parent=5 // pred_check
        %p145 = pneg %p144
      $region22: #{tpu_custom_call.1} parent=5 // pred_check_branch
        %147 = sbr.rel (%p145) target = $region24
      $region23: #{tpu_custom_call.1} parent=5 // pred_region
        // Predicated region
        $region25: #{tpu_custom_call.1} parent=23 // pred_check
          %p148 = pneg %p47
        $region26: #{tpu_custom_call.1} parent=23 // pred_check_branch
          %150 = sbr.rel (%p148) target = $region28
        $region27: #{tpu_custom_call.1} parent=23 // pred_region
          %s151 = sand.u32 %s37, 1
          %s152 = scalar_lea.sflag [#allocation4], %s151
          %s153 = sand.u32 %s37, 1
          %s154 = smul.addr %s153, 12
          %s155 = scalar_lea.vmem [#allocation3], %s154
          %s157 = ssub.s32 192, 192
          %158 = vsyncadd %s152, %s157
          %s159 = smul.addr %s22, 3
          %s160 = smul.addr %s159, 64
          %s161 = scalar_lea.hbm %s0, %s160
          %s163 = sshll.u32 %s155, 4
          %s164 = int_to_ptr.vmem [resolvable:$true] %s163
          %166 = dma.hbm_to_vmem [thread:$0]  %s161, 192, %s164, %s152
        $region28: #{tpu_custom_call.1} parent=23 // pred_fallthru
          _
      $region24: #{tpu_custom_call.1} parent=5 // pred_fallthru
        _
      %p167 = scmp.le.s32.totalorder 1, %s15
      %p168 = scmp.lt.s32.totalorder %s15, 3
      %p169 = pnand %p167, %p168
      %p170 = pneg %p169
      // Predicated region
      $region29: #{tpu_custom_call.1} parent=5 // pred_check
        _
      $region30: #{tpu_custom_call.1} parent=5 // pred_check_branch
        %172 = sbr.rel (%p169) target = $region32
      $region31: #{tpu_custom_call.1} parent=5 // pred_region
        %s173 = ssub.s32 %s15, 1
        %s174 = sand.u32 %s40, 1
        %s175 = scalar_lea.sflag [#allocation4], %s174
        %s176 = sand.u32 %s40, 1
        %s177 = smul.addr %s176, 12
        %s178 = scalar_lea.vmem [#allocation3], %s177
        // Predicated region
        $region33: #{tpu_custom_call.1} parent=31 // pred_check
          %p179 = pneg %p53
        $region34: #{tpu_custom_call.1} parent=31 // pred_check_branch
          %181 = sbr.rel (%p179) target = $region36
        $region35: #{tpu_custom_call.1} parent=31 // pred_region
          %182 = dma.done %s175, 192
        $region36: #{tpu_custom_call.1} parent=31 // pred_fallthru
          _
        %s183 = sand.u32 %s40, 1
        %s184 = scalar_lea.sflag [#allocation4], %s183
        %s185 = sand.u32 %s40, 1
        %s186 = smul.addr %s185, 12
        %s187 = scalar_lea.vmem [#allocation3], %s186
        %p188 = pneg %p53
        %p189 = pneg %p50
        %p190 = pneg %p74
        %p191 = pneg %p71
        %p192 = pneg %p95
        %p193 = pneg %p92
        %p194 = pneg %p123
        %p195 = pneg %p120
        %s196 = sand.u32 %s110, 1
        %s197 = scalar_lea.sflag [#allocation5], %s196
        %s198 = sand.u32 %s110, 1
        %s199 = smul.addr %s198, 48
        %s200 = scalar_lea.vmem [#allocation6], %s199
        %s201 = smul.u32 3, %s25
        %v202 = vld [vmem:[%s178] sm:$0xff]
        %v203 = vld [vmem:[%s178 + $0x8] sm:$0xf]
        %v206 = vcombine.high %v202, %v202
        %207 = vrot.lane.b32.xlu0 %v202, 111
        %v208 = vpop.permute.xlu0 %207
        %209 = vrot.lane.b32.xlu0 %v206, 111
        %v210 = vpop.permute.xlu0 %209
        %211 = vrot.lane.b32.xlu0 %v203, 111
        %v212 = vpop.permute.xlu0 %211
        %vm213 = vcmask 908288
        %v214 = vsel %vm213, %v208, %v210
        %v215 = vsel %vm213, %v210, %v212
        %219 = vst [vmem:[#allocation2] sm:$0xf] %v214
        %220 = vst [vmem:[#allocation2 + $0x8] sm:$0xf] %v215
        %vm221 = vcmask 257024
        %222 = vst.msk [vmem:[#allocation2 + $0x10] sm:$0xf] %vm221, %v212
        %v223 = vld [vmem:[%s178] sm:$0xff]
        %v224 = vld [vmem:[%s178 + $0x8] sm:$0xf]
        %v227 = vcombine.low %v223, %v223
        %v228 = vcombine.low %v224, %v224
        %229 = vrot.lane.b32.xlu0 %v227, 110
        %v230 = vpop.permute.xlu0 %229
        %231 = vrot.lane.b32.xlu0 %v223, 110
        %v232 = vpop.permute.xlu0 %231
        %233 = vrot.lane.b32.xlu0 %v228, 110
        %v234 = vpop.permute.xlu0 %233
        %vm235 = vcmask 900096
        %v236 = vsel %vm235, %v230, %v232
        %v237 = vsel %vm235, %v232, %v234
        %241 = vst [vmem:[#allocation2] sm:$0xf0] %v236
        %242 = vst [vmem:[#allocation2 + $0x8] sm:$0xf0] %v237
        %vm243 = vcmask 261124
        %244 = vst.msk [vmem:[#allocation2 + $0x10] sm:$0xf0] %vm243, %v234
        %v245 = vld [vmem:[%s178] sm:$0xff]
        %v246 = vld [vmem:[%s178 + $0x8] sm:$0xf]
        %v249 = vcombine.high %v245, %v245
        %250 = vrot.lane.b32.xlu0 %v245, 109
        %v251 = vpop.permute.xlu0 %250
        %252 = vrot.lane.b32.xlu0 %v249, 109
        %v253 = vpop.permute.xlu0 %252
        %254 = vrot.lane.b32.xlu0 %v246, 109
        %v255 = vpop.permute.xlu0 %254
        %vm256 = vcmask 891904
        %v257 = vsel %vm256, %v251, %v253
        %v258 = vsel %vm256, %v253, %v255
        %262 = vst [vmem:[#allocation2 + $0x18] sm:$0xf] %v257
        %263 = vst [vmem:[#allocation2 + $0x20] sm:$0xf] %v258
        %264 = vst.msk [vmem:[#allocation2 + $0x28] sm:$0xf] %vm221, %v255
        %v265 = vld [vmem:[%s178] sm:$0xff]
        %v266 = vld [vmem:[%s178 + $0x8] sm:$0xf]
        %v269 = vcombine.low %v265, %v265
        %v270 = vcombine.low %v266, %v266
        %271 = vrot.lane.b32.xlu0 %v269, 93
        %v272 = vpop.permute.xlu0 %271
        %273 = vrot.lane.b32.xlu0 %v265, 93
        %v274 = vpop.permute.xlu0 %273
        %275 = vrot.lane.b32.xlu0 %v270, 93
        %v276 = vpop.permute.xlu0 %275
        %vm277 = vcmask 760832
        %v278 = vsel %vm277, %v272, %v274
        %v279 = vsel %vm277, %v274, %v276
        %283 = vst [vmem:[#allocation2 + $0x18] sm:$0xf0] %v278
        %284 = vst [vmem:[#allocation2 + $0x20] sm:$0xf0] %v279
        %285 = vst.msk [vmem:[#allocation2 + $0x28] sm:$0xf0] %vm243, %v276
        %v286 = vld [vmem:[%s178] sm:$0xff]
        %v287 = vld [vmem:[%s178 + $0x8] sm:$0xf]
        %v290 = vcombine.high %v286, %v286
        %291 = vrot.lane.b32.xlu0 %v286, 92
        %v292 = vpop.permute.xlu0 %291
        %293 = vrot.lane.b32.xlu0 %v290, 92
        %v294 = vpop.permute.xlu0 %293
        %295 = vrot.lane.b32.xlu0 %v287, 92
        %v296 = vpop.permute.xlu0 %295
        %vm297 = vcmask 752640
        %v298 = vsel %vm297, %v292, %v294
        %v299 = vsel %vm297, %v294, %v296
        %303 = vst [vmem:[#allocation2 + $0x30] sm:$0xf] %v298
        %304 = vst [vmem:[#allocation2 + $0x38] sm:$0xf] %v299
        %305 = vst.msk [vmem:[#allocation2 + $0x40] sm:$0xf] %vm221, %v296
        %v306 = vld [vmem:[%s178] sm:$0xff]
        %v307 = vld [vmem:[%s178 + $0x8] sm:$0xf]
        %v310 = vcombine.low %v306, %v306
        %v311 = vcombine.low %v307, %v307
        %312 = vrot.lane.b32.xlu0 %v310, 91
        %v313 = vpop.permute.xlu0 %312
        %314 = vrot.lane.b32.xlu0 %v306, 91
        %v315 = vpop.permute.xlu0 %314
        %316 = vrot.lane.b32.xlu0 %v311, 91
        %v317 = vpop.permute.xlu0 %316
        %vm318 = vcmask 744448
        %v319 = vsel %vm318, %v313, %v315
        %v320 = vsel %vm318, %v315, %v317
        %324 = vst [vmem:[#allocation2 + $0x30] sm:$0xf0] %v319
        %325 = vst [vmem:[#allocation2 + $0x38] sm:$0xf0] %v320
        %326 = vst.msk [vmem:[#allocation2 + $0x40] sm:$0xf0] %vm243, %v317
        %v327 = vld [vmem:[%s178] sm:$0xff]
        %v328 = vld [vmem:[%s178 + $0x8] sm:$0xf]
        %v331 = vcombine.high %v327, %v327
        %332 = vrot.lane.b32.xlu0 %v327, 75
        %v333 = vpop.permute.xlu0 %332
        %334 = vrot.lane.b32.xlu0 %v331, 75
        %v335 = vpop.permute.xlu0 %334
        %336 = vrot.lane.b32.xlu0 %v328, 75
        %v337 = vpop.permute.xlu0 %336
        %vm338 = vcmask 613376
        %v339 = vsel %vm338, %v333, %v335
        %v340 = vsel %vm338, %v335, %v337
        %344 = vst [vmem:[#allocation2 + $0x48] sm:$0xf] %v339
        %345 = vst [vmem:[#allocation2 + $0x50] sm:$0xf] %v340
        %346 = vst.msk [vmem:[#allocation2 + $0x58] sm:$0xf] %vm221, %v337
        %v347 = vld [vmem:[%s178] sm:$0xff]
        %v348 = vld [vmem:[%s178 + $0x8] sm:$0xf]
        %v351 = vcombine.low %v347, %v347
        %v352 = vcombine.low %v348, %v348
        %353 = vrot.lane.b32.xlu0 %v351, 74
        %v354 = vpop.permute.xlu0 %353
        %355 = vrot.lane.b32.xlu0 %v347, 74
        %v356 = vpop.permute.xlu0 %355
        %357 = vrot.lane.b32.xlu0 %v352, 74
        %v358 = vpop.permute.xlu0 %357
        %vm359 = vcmask 605184
        %v360 = vsel %vm359, %v354, %v356
        %v361 = vsel %vm359, %v356, %v358
        %365 = vst [vmem:[#allocation2 + $0x48] sm:$0xf0] %v360
        %366 = vst [vmem:[#allocation2 + $0x50] sm:$0xf0] %v361
        %367 = vst.msk [vmem:[#allocation2 + $0x58] sm:$0xf0] %vm243, %v358
        %v368 = vld [vmem:[%s178] sm:$0xff]
        %v369 = vld [vmem:[%s178 + $0x8] sm:$0xf]
        %v372 = vcombine.high %v368, %v368
        %373 = vrot.lane.b32.xlu0 %v368, 73
        %v374 = vpop.permute.xlu0 %373
        %375 = vrot.lane.b32.xlu0 %v372, 73
        %v376 = vpop.permute.xlu0 %375
        %377 = vrot.lane.b32.xlu0 %v369, 73
        %v378 = vpop.permute.xlu0 %377
        %vm379 = vcmask 596992
        %v380 = vsel %vm379, %v374, %v376
        %v381 = vsel %vm379, %v376, %v378
        %385 = vst [vmem:[#allocation2 + $0x60] sm:$0xf] %v380
        %386 = vst [vmem:[#allocation2 + $0x68] sm:$0xf] %v381
        %387 = vst.msk [vmem:[#allocation2 + $0x70] sm:$0xf] %vm221, %v378
        %v388 = vld [vmem:[%s1] sm:$0xff]
        %v389 = vld [vmem:[%s1 + $0x8] sm:$0xff]
        %v390 = vld [vmem:[#allocation2] sm:$0xff]
        %v391 = vld [vmem:[#allocation2 + $0x8] sm:$0xff]
        %v392 = vld [vmem:[#allocation2 + $0x10] sm:$0xff]
        %v393 = vld [vmem:[#allocation2 + $0x18] sm:$0xff]
        %v394 = vld [vmem:[#allocation2 + $0x20] sm:$0xff]
        %v395 = vld [vmem:[#allocation2 + $0x28] sm:$0xff]
        %v396 = vld [vmem:[#allocation2 + $0x30] sm:$0xff]
        %v397 = vld [vmem:[#allocation2 + $0x38] sm:$0xff]
        %v398 = vld [vmem:[#allocation2 + $0x40] sm:$0xff]
        %v399 = vld [vmem:[#allocation2 + $0x48] sm:$0xff]
        %v400 = vld [vmem:[#allocation2 + $0x50] sm:$0xff]
        %v401 = vld [vmem:[#allocation2 + $0x58] sm:$0xff]
        %v402 = vld [vmem:[#allocation2 + $0x60] sm:$0xf]
        %v403 = vld [vmem:[#allocation2 + $0x68] sm:$0xf]
        %v404 = vld [vmem:[#allocation2 + $0x70] sm:$0xf]
        %v405 = vld [vmem:[%s2] sm:$0xff]
        %v406 = vld [vmem:[%s2 + $0x8] sm:$0xff]
        %408 = vset.pattern.permute.xlu0 0
        %409 = vperm.xlu0 %408, %v405
        %v410 = vpop.permute.xlu0 %409
        %413 = vset.pattern.permute.xlu0 0
        %414 = vperm.xlu0 %413, %v406
        %v415 = vpop.permute.xlu0 %414
        %vm417 = vcmask 293888
        %v419 = vsel %vm417, %v388, 0
        %v422 = vsel %vm417, %v389, 0
        %vm424 = vcmask 1043456
        %v426 = vsel %vm424, %v402, 0
        %v429 = vsel %vm424, %v403, 0
        %v432 = vsel %vm424, %v404, 0
        %434 = vmatprep.subr.mxu0 0.0
        %435 = vmatpush1.msra.mxu0 0.0
        %436 = vmatprep.subr.mxu0 0.0
        %437 = vmatpush1.msra.mxu0 0.0
        %438 = vmatprep.subr.mxu0 0.0
        %439 = vmatpush1.msra.mxu0 0.0
        %440 = vmatprep.subr.mxu0 0.0
        %441 = vmatpush1.msra.mxu0 0.0
        %442 = vmatprep.subr.mxu0 0.0
        %443 = vmatpush1.msra.mxu0 0.0
        %444 = vmatprep.subr.mxu0 0.0
        %445 = vmatpush1.msra.mxu0 0.0
        %446 = vmatprep.subr.mxu0 0.0
        %447 = vmatpush1.msra.mxu0 0.0
        %448 = vmatprep.subr.mxu0 0.0
        %449 = vmatpush1.msra.mxu0 0.0
        %450 = vmatprep.subr.mxu0 0.0
        %451 = vmatpush1.msra.mxu0 0.0
        %452 = vmatprep.subr.mxu0 0.0
        %453 = vmatpush1.msra.mxu0 0.0
        %454 = vmatprep.subr.mxu0 0.0
        %455 = vmatpush1.msra.mxu0 0.0
        %456 = vmatprep.subr.mxu0 %v429
        %457 = vmatpush1.msra.mxu0 %v426
        %458 = vmatprep.subr.mxu0 %v400
        %459 = vmatpush1.msra.mxu0 %v399
        %460 = vmatprep.subr.mxu0 %v397
        %461 = vmatpush1.msra.mxu0 %v396
        %462 = vmatprep.subr.mxu0 %v394
        %463 = vmatpush1.msra.mxu0 %v393
        %464 = vmatprep.subr.mxu0 %v391
        %465 = vmatpush1.msra.mxu0 %v390
        %466 = vmatprep.subr.mxu0 0.0
        %467 = vmatpush2.msra.mxu0 0.0
        %468 = vmatprep.subr.mxu0 0.0
        %469 = vmatpush2.msra.mxu0 0.0
        %470 = vmatprep.subr.mxu0 0.0
        %471 = vmatpush2.msra.mxu0 0.0
        %472 = vmatprep.subr.mxu0 0.0
        %473 = vmatpush2.msra.mxu0 0.0
        %474 = vmatprep.subr.mxu0 0.0
        %475 = vmatpush2.msra.mxu0 0.0
        %476 = vmatprep.subr.mxu0 0.0
        %477 = vmatpush2.msra.mxu0 0.0
        %478 = vmatprep.subr.mxu0 0.0
        %479 = vmatpush2.msra.mxu0 0.0
        %480 = vmatprep.subr.mxu0 0.0
        %481 = vmatpush2.msra.mxu0 0.0
        %482 = vmatprep.subr.mxu0 0.0
        %483 = vmatpush2.msra.mxu0 0.0
        %484 = vmatprep.subr.mxu0 0.0
        %485 = vmatpush2.msra.mxu0 0.0
        %486 = vmatprep.subr.mxu0 0.0
        %487 = vmatpush2.msra.mxu0 0.0
        %488 = vmatprep.subr.mxu0 0.0
        %489 = vmatpush2.msra.mxu0 0.0
        %490 = vmatprep.subr.mxu0 0.0
        %491 = vmatpush2.msra.mxu0 0.0
        %492 = vmatprep.subr.mxu0 0.0
        %493 = vmatpush2.msra.mxu0 0.0
        %494 = vmatprep.subr.mxu0 0.0
        %495 = vmatpush2.msra.mxu0 0.0
        %496 = vmatprep.subr.mxu0 0.0
        %497 = vmatpush2.msra.mxu0 0.0
        %498 = vmatprep.mubr.f32.mxu0 0.0
        %499 = vmatmul.mubr.f32.gmra.mxu0 %v419
        %v500 = vpop.f32.mrf.mxu0
        %v501 = vadd.f32 %v410, %v500
        %v502 = vpop.f32.mrf.mxu0
        %v503 = vadd.f32 %v410, %v502
        %504 = vmatprep.mubr.f32.mxu0 0.0
        %505 = vmatmul.mubr.f32.gmra.mxu0 %v422
        %v506 = vpop.f32.mrf.mxu0
        %v507 = vadd.f32 %v415, %v506
        %v508 = vpop.f32.mrf.mxu0
        %v509 = vadd.f32 %v415, %v508
        %510 = vdwg.mxu0
        %511 = vmatprep.subr.mxu0 0.0
        %512 = vmatpush1.msra.mxu0 0.0
        %513 = vmatprep.subr.mxu0 0.0
        %514 = vmatpush1.msra.mxu0 0.0
        %515 = vmatprep.subr.mxu0 0.0
        %516 = vmatpush1.msra.mxu0 0.0
        %517 = vmatprep.subr.mxu0 0.0
        %518 = vmatpush1.msra.mxu0 0.0
        %519 = vmatprep.subr.mxu0 0.0
        %520 = vmatpush1.msra.mxu0 0.0
        %521 = vmatprep.subr.mxu0 0.0
        %522 = vmatpush1.msra.mxu0 0.0
        %523 = vmatprep.subr.mxu0 0.0
        %524 = vmatpush1.msra.mxu0 0.0
        %525 = vmatprep.subr.mxu0 0.0
        %526 = vmatpush1.msra.mxu0 0.0
        %527 = vmatprep.subr.mxu0 0.0
        %528 = vmatpush1.msra.mxu0 0.0
        %529 = vmatprep.subr.mxu0 0.0
        %530 = vmatpush1.msra.mxu0 0.0
        %531 = vmatprep.subr.mxu0 0.0
        %532 = vmatpush1.msra.mxu0 0.0
        %533 = vmatprep.subr.mxu0 0.0
        %534 = vmatpush1.msra.mxu0 %v432
        %535 = vmatprep.subr.mxu0 0.0
        %536 = vmatpush1.msra.mxu0 %v401
        %537 = vmatprep.subr.mxu0 0.0
        %538 = vmatpush1.msra.mxu0 %v398
        %539 = vmatprep.subr.mxu0 0.0
        %540 = vmatpush1.msra.mxu0 %v395
        %541 = vmatprep.subr.mxu0 0.0
        %542 = vmatpush1.msra.mxu0 %v392
        %543 = vmatprep.subr.mxu0 0.0
        %544 = vmatpush2.msra.mxu0 0.0
        %545 = vmatprep.subr.mxu0 0.0
        %546 = vmatpush2.msra.mxu0 0.0
        %547 = vmatprep.subr.mxu0 0.0
        %548 = vmatpush2.msra.mxu0 0.0
        %549 = vmatprep.subr.mxu0 0.0
        %550 = vmatpush2.msra.mxu0 0.0
        %551 = vmatprep.subr.mxu0 0.0
        %552 = vmatpush2.msra.mxu0 0.0
        %553 = vmatprep.subr.mxu0 0.0
        %554 = vmatpush2.msra.mxu0 0.0
        %555 = vmatprep.subr.mxu0 0.0
        %556 = vmatpush2.msra.mxu0 0.0
        %557 = vmatprep.subr.mxu0 0.0
        %558 = vmatpush2.msra.mxu0 0.0
        %559 = vmatprep.subr.mxu0 0.0
        %560 = vmatpush2.msra.mxu0 0.0
        %561 = vmatprep.subr.mxu0 0.0
        %562 = vmatpush2.msra.mxu0 0.0
        %563 = vmatprep.subr.mxu0 0.0
        %564 = vmatpush2.msra.mxu0 0.0
        %565 = vmatprep.subr.mxu0 0.0
        %566 = vmatpush2.msra.mxu0 0.0
        %567 = vmatprep.subr.mxu0 0.0
        %568 = vmatpush2.msra.mxu0 0.0
        %569 = vmatprep.subr.mxu0 0.0
        %570 = vmatpush2.msra.mxu0 0.0
        %571 = vmatprep.subr.mxu0 0.0
        %572 = vmatpush2.msra.mxu0 0.0
        %573 = vmatprep.subr.mxu0 0.0
        %574 = vmatpush2.msra.mxu0 0.0
        %575 = vmatprep.mubr.f32.mxu0 0.0
        %576 = vmatmul.mubr.f32.gmra.mxu0 %v419
        %v577 = vpop.f32.mrf.mxu0
        %v578 = vadd.f32 %v410, %v577
        %v579 = vpop.f32.mrf.mxu0
        %580 = vmatprep.mubr.f32.mxu0 0.0
        %581 = vmatmul.mubr.f32.gmra.mxu0 %v422
        %v582 = vpop.f32.mrf.mxu0
        %v583 = vadd.f32 %v415, %v582
        %v584 = vpop.f32.mrf.mxu0
        %585 = vdwg.mxu0
        %586 = vst [vmem:[%s200] sm:$0xff] %v501
        %587 = vst [vmem:[%s200 + $0x8] sm:$0xff] %v503
        %vm588 = vcmask 261120
        %589 = vst.msk [vmem:[%s200 + $0x10] sm:$0xff] %vm588, %v578
        %590 = vst [vmem:[%s200 + $0x18] sm:$0xff] %v507
        %591 = vst [vmem:[%s200 + $0x20] sm:$0xff] %v509
        %592 = vst.msk [vmem:[%s200 + $0x28] sm:$0xff] %vm588, %v583
        %s593 = sand.u32 %s110, 1
        %s594 = scalar_lea.sflag [#allocation5], %s593
        %s595 = sand.u32 %s110, 1
        %s596 = smul.addr %s595, 48
        %s597 = scalar_lea.vmem [#allocation6], %s596
        // Predicated region
        $region37: #{tpu_custom_call.1} parent=31 // pred_check
          %p598 = pneg %p120
        $region38: #{tpu_custom_call.1} parent=31 // pred_check_branch
          %600 = sbr.rel (%p598) target = $region40
        $region39: #{tpu_custom_call.1} parent=31 // pred_region
          %s601 = smul.u32 3, %s25
          %s603 = ssub.s32 768, 768
          %604 = vsyncadd %s594, %s603
          %s605 = smul.addr %s24, 6
          %s606 = sadd.s32 %s601, %s605
          %s607 = smul.addr %s606, 128
          %s608 = scalar_lea.hbm %s3, %s607
          %s609 = sshll.u32 %s597, 4
          %s610 = int_to_ptr.vmem [resolvable:$true] %s609
          %615 = dma.vmem_to_hbm [thread:$0]  %s610, 768, %s608, %s594, 384, 384, 24
        $region40: #{tpu_custom_call.1} parent=31 // pred_fallthru
          _
      $region32: #{tpu_custom_call.1} parent=5 // pred_fallthru
        _
      %p616 = scmp.le.s32.totalorder 2, %s15
      // Predicated region
      $region41: #{tpu_custom_call.1} parent=5 // pred_check
        %p617 = pneg %p616
      $region42: #{tpu_custom_call.1} parent=5 // pred_check_branch
        %619 = sbr.rel (%p617) target = $region44
      $region43: #{tpu_custom_call.1} parent=5 // pred_region
        %s620 = ssub.s32 %s15, 2
        // Predicated region
        $region45: #{tpu_custom_call.1} parent=43 // pred_check
          %p621 = pneg %p126
        $region46: #{tpu_custom_call.1} parent=43 // pred_check_branch
          %623 = sbr.rel (%p621) target = $region48
        $region47: #{tpu_custom_call.1} parent=43 // pred_region
          %s624 = sand.u32 %s111, 1
          %s625 = scalar_lea.sflag [#allocation5], %s624
          %s626 = sand.u32 %s111, 1
          %s627 = smul.addr %s626, 48
          %s628 = scalar_lea.vmem [#allocation6], %s627
          %629 = dma.done %s625, 768
        $region48: #{tpu_custom_call.1} parent=43 // pred_fallthru
          _
      $region44: #{tpu_custom_call.1} parent=5 // pred_fallthru
        _
    $region6: #{tpu_custom_call.1} parent=1 // loop_footer
      %s19 = sadd.s32 1, %s15
    $region7: #{tpu_custom_call.1} parent=1 // loop_footer_branch
      %14 = sbr.rel target = $region3
    $region8: #{tpu_custom_call.1} parent=1 // loop_exit
      _
    %630 = vsyncpa [#allocation4], 1
    %s631 = scalar_lea.sflag [#allocation4], 1
    %632 = vsyncpa %s631, 1
    %633 = vsyncpa [#allocation5], 1
    %s634 = scalar_lea.sflag [#allocation5], 1
    %635 = vsyncpa %s634, 1

</llo_original>
